<compile_context>
chip_gen: v5e
topology: v5e:2x2
jax: 0.10.0
libtpu: 0.0.40
codegen_flags: <defaults>
</compile_context>

<pallas_src>
import functools

import numpy as np
import jax
import jax.numpy as jnp
from jax import lax
from jax.experimental import pallas as pl
from jax.experimental.pallas import tpu as pltpu


# ---------------------------------------------------------------------------
# omega tables (match torch.logspace(0, 2/dim - 1, dim//2, base=100) semantics)
# ---------------------------------------------------------------------------
def _get_omegas_np(alpha, dim):
    half = dim // 2

    def logspace(steps):
        if steps <= 0:
            return np.zeros((0,), dtype=np.float32)
        exps = np.linspace(0.0, 2.0 / dim - 1.0, steps)
        return (alpha * np.power(100.0, exps)).astype(np.float32)

    omega_1 = logspace(half)
    omega_2 = omega_1 if dim % 2 == 0 else logspace(half + 1)
    return omega_1, omega_2


def _round_up(x, m):
    return ((x + m - 1) // m) * m


def _cdiv(a, b):
    return (a + b - 1) // b


# ---------------------------------------------------------------------------
# Host-side static tables:
#   sel   (dim_pad, K_pad) 0/1 : output row d selects one basis row
#   omega (dim_pad, 1)         : per-row frequency (0 for remainder/pad rows)
#   phase (dim_pad, 1)         : pi/2 for non-symmetric "cos" rows, else 0
# basis rows (built in-kernel): [x_0..x_{F-1}, sin(x_0).., cos(x_0)..] if any
# symmetric field, else just [x_0..x_{F-1}].
# ---------------------------------------------------------------------------
def _build_tables(fields, sym_fields, dim, alpha):
    F = len(fields)
    per_dim = dim // F
    h1 = per_dim // 2
    h2 = per_dim - h1
    om1, om2 = _get_omegas_np(alpha, per_dim)
    any_sym = any(f in sym_fields for f in fields)
    K = 3 * F if any_sym else F
    K_pad = _round_up(max(K, 1), 8)
    dim_pad = _round_up(dim, 8)

    sel = np.zeros((dim_pad, K_pad), np.float32)
    omega = np.zeros((dim_pad, 1), np.float32)
    phase = np.zeros((dim_pad, 1), np.float32)

    for fi, fname in enumerate(fields):
        is_sym = fname in sym_fields
        base = fi * per_dim
        # p1 rows: sin(x*om1)  /  sin(sin(x)*om1)
        for j in range(h1):
            r = base + j
            omega[r, 0] = om1[j]
            sel[r, (F + fi) if is_sym else fi] = 1.0
        # p2 rows: cos(x*om2)=sin(x*om2+pi/2)  /  sin(cos(x)*om2)
        for j in range(h2):
            r = base + h1 + j
            omega[r, 0] = om2[j]
            if is_sym:
                sel[r, 2 * F + fi] = 1.0
            else:
                sel[r, fi] = 1.0
                phase[r, 0] = np.pi / 2.0
    # remainder rows (dim % F) and rows [dim, dim_pad): sel=0, omega=0,
    # phase=0  ->  sin(0) = 0, matching torch's zero padding.
    return sel, omega, phase, any_sym, K, K_pad, dim_pad


# ---------------------------------------------------------------------------
# Pallas kernel: tokens on lanes, encoding dim on sublanes.
#   x_ref   : (F, TM)          field-major token block
#   sel_ref : (dim_pad, K_pad) 0/1 row-selection matrix
#   om_ref  : (dim_pad, 1)     per-row omega
#   ph_ref  : (dim_pad, 1)     per-row phase
#   o_ref   : (dim_pad, TM)    dim-major output tile
# ---------------------------------------------------------------------------
def _posenc_kernel(x_ref, sel_ref, om_ref, ph_ref, o_ref, *, any_sym, k_used, k_pad):
    xb = x_ref[...].astype(jnp.float32)                      # (F, TM)
    tm = xb.shape[1]

    if any_sym:
        # full-block pre-transforms: 2 EUP calls at full sublane occupancy
        basis = jnp.concatenate([xb, jnp.sin(xb), jnp.cos(xb)], axis=0)  # (3F, TM)
    else:
        basis = xb                                           # (F, TM)

    if k_pad > k_used:
        basis = jnp.concatenate(
            [basis, jnp.zeros((k_pad - k_used, tm), jnp.float32)], axis=0)

    # 0/1 row-selection "gather" on the otherwise-idle MXU -> (dim_pad, TM).
    # HIGHEST precision keeps the selected f32 values exact.
    pre = jnp.dot(sel_ref[...], basis,
                  preferred_element_type=jnp.float32,
                  precision=lax.Precision.HIGHEST)

    arg = pre * om_ref[...] + ph_ref[...]                    # (dim_pad, TM)
    # ONE full-width transcendental + ONE unmasked full-tile store.
    o_ref[...] = jnp.sin(arg).astype(o_ref.dtype)


# ---------------------------------------------------------------------------
# Module wrapper (pure-JAX glue around the Pallas hot path)
# ---------------------------------------------------------------------------
class PositionEncoder:
    def __init__(self, input_name, fields, sym_fields, dim, alpha=1000, out_dtype=None):
        self.input_name = input_name
        self.fields = list(fields)
        self.sym_fields = list(sym_fields)
        self.dim = dim
        self.alpha = alpha
        self.out_dtype = out_dtype  # e.g. jnp.bfloat16 for bf16 consumers
        self.per_input_dim = self.dim // len(self.fields)
        self.remainder_dim = self.dim % len(self.fields)

    def __call__(self, inputs: dict):
        xs = jnp.stack(
            [inputs[f"{self.input_name}_{f}"] for f in self.fields], axis=0
        )  # (F, *batch_shape)
        F = xs.shape[0]
        batch_shape = xs.shape[1:]
        M = int(np.prod(batch_shape))
        x2 = xs.reshape(F, M)

        sel_np, om_np, ph_np, any_sym, K, K_pad, dim_pad = _build_tables(
            self.fields, self.sym_fields, self.dim, self.alpha)

        # ---- token tile: lane-aligned, large (amortizes per-step overhead;
        # VMEM use is only a few MB even at TM=8192), with >=2 grid steps when
        # there is enough work so multi-TC chips (v7x) can split the
        # "parallel" axis. Padding overhead bounded to < n_steps*128 tokens.
        TM_MAX = 8192
        m128 = _round_up(max(M, 1), 128)
        n_steps = max(1, _cdiv(m128, TM_MAX))
        if n_steps == 1 and m128 > 1024:
            n_steps = 2
        tm = min(m128, _round_up(_cdiv(m128, n_steps), 128))
        M_pad = n_steps * tm

        if M_pad != M:
            x2 = jnp.pad(x2, ((0, 0), (0, M_pad - M)))

        sel = jnp.asarray(sel_np)
        om = jnp.asarray(om_np)
        ph = jnp.asarray(ph_np)

        out_dtype = jnp.dtype(self.out_dtype) if self.out_dtype is not None else x2.dtype
        in_bytes = x2.dtype.itemsize
        out_bytes = jnp.dtype(out_dtype).itemsize

        kernel = functools.partial(
            _posenc_kernel, any_sym=any_sym, k_used=K, k_pad=K_pad)

        cost = pl.CostEstimate(
            flops=int(2 * dim_pad * K_pad * M_pad + 3 * dim_pad * M_pad),
            transcendentals=int((dim_pad + (2 * F if any_sym else 0)) * M_pad),
            bytes_accessed=int(F * M_pad * in_bytes + dim_pad * M_pad * out_bytes),
        )

        out_t = pl.pallas_call(
            kernel,
            out_shape=jax.ShapeDtypeStruct((dim_pad, M_pad), out_dtype),
            grid=(M_pad // tm,),
            in_specs=[
                pl.BlockSpec((F, tm), lambda i: (0, i)),            # tokens on lanes
                pl.BlockSpec((dim_pad, K_pad), lambda i: (0, 0)),   # selection matrix
                pl.BlockSpec((dim_pad, 1), lambda i: (0, 0)),       # omega column
                pl.BlockSpec((dim_pad, 1), lambda i: (0, 0)),       # phase column
            ],
            out_specs=pl.BlockSpec((dim_pad, tm), lambda i: (0, i)),
            compiler_params=pltpu.CompilerParams(dimension_semantics=("parallel",)),
            cost_estimate=cost,
        )(x2, sel, om, ph)  # (dim_pad, M_pad), dim-major, unmasked stores

        # layout plumbing back to token-major; XLA fuses this into the consumer.
        # TODO(synk): expose the dim-major (dim, M) layout directly to consumers
        # that can fold it into their dot_general to avoid the transpose.
        out = out_t[:self.dim, :M].T.reshape(*batch_shape, self.dim)
        return out


# ---------------------------------------------------------------------------
# Pure-JAX reference (mirrors the torch implementation) for validation
# ---------------------------------------------------------------------------
def _pos_enc_ref(xs, dim, alpha, sym):
    om1_np, om2_np = _get_omegas_np(alpha, dim)
    om1 = jnp.asarray(om1_np, dtype=jnp.float32)
    om2 = jnp.asarray(om2_np, dtype=jnp.float32)
    xs = xs.astype(jnp.float32)[..., None]
    if sym:
        p1 = jnp.sin(jnp.sin(xs) * om1)
        p2 = jnp.sin(jnp.cos(xs) * om2)
    else:
        p1 = jnp.sin(xs * om1)
        p2 = jnp.cos(xs * om2)
    return jnp.concatenate([p1, p2], axis=-1)


def _reference_forward(encoder: PositionEncoder, inputs: dict):
    encs = []
    for f in encoder.fields:
        encs.append(
            _pos_enc_ref(
                inputs[f"{encoder.input_name}_{f}"],
                encoder.per_input_dim,
                encoder.alpha,
                sym=f in encoder.sym_fields,
            )
        )
    if encoder.remainder_dim:
        encs.append(jnp.zeros_like(encs[0])[..., : encoder.remainder_dim])
    return jnp.concatenate(encs, axis=-1)


if __name__ == "__main__":
    input_name = "hit"
    fields = ["phi", "eta", "r", "z"]
    sym_fields = ["phi", "r"]
    dim = 30  # per_input_dim = 7 (odd -> omega_2 longer), remainder = 2
    alpha = 1000

    batch, seq = 2, 96  # M = 192 -> pads to 256, single grid step

    key = jax.random.PRNGKey(0)
    keys = jax.random.split(key, len(fields))
    inputs = {
        f"{input_name}_{f}": jax.random.uniform(
            k, (batch, seq), dtype=jnp.float32, minval=-1.0, maxval=1.0
        )
        for f, k in zip(fields, keys)
    }

    encoder = PositionEncoder(input_name, fields, sym_fields, dim, alpha)

    out = encoder(inputs)
    out = jax.block_until_ready(out)

    ref = jax.block_until_ready(_reference_forward(encoder, inputs))

    assert out.shape == (batch, seq, dim), out.shape
    # tolerance covers cos(z)=sin(z+pi/2) rewrite and sin range-reduction
    # differences at |arg| up to alpha=1000 (both well below 2e-3).
    np.testing.assert_allclose(np.asarray(out), np.asarray(ref), rtol=1e-3, atol=2e-3)

    print("KERNEL_OK")
</pallas_src>

<mosaic_0001>
module attributes {stable_mosaic.version = 11 : i64} {
  func.func @_posenc_kernel(%arg0: i32, %arg1: memref<4x256xf32, #tpu.memory_space<vmem>>, %arg2: memref<32x16xf32, #tpu.memory_space<vmem>>, %arg3: memref<32x1xf32, #tpu.memory_space<vmem>>, %arg4: memref<32x1xf32, #tpu.memory_space<vmem>>, %arg5: memref<32x256xf32, #tpu.memory_space<vmem>>) attributes {dimension_semantics = [#tpu.dimension_semantics<parallel>], iteration_bounds = array<i64: 1>, scalar_prefetch = 0 : i64, scratch_operands = 0 : i64, tpu.core_type = #tpu.core_type<tc>, window_params = [{transform_indices = @transform_0, window_bounds = array<i64: 4, 256>}, {pipeline_mode = #tpu.pipeline_mode<synchronous>, transform_indices = @transform_1, window_bounds = array<i64: 32, 16>}, {pipeline_mode = #tpu.pipeline_mode<synchronous>, transform_indices = @transform_2, window_bounds = array<i64: 32, 1>}, {pipeline_mode = #tpu.pipeline_mode<synchronous>, transform_indices = @transform_3, window_bounds = array<i64: 32, 1>}, {transform_indices = @transform_4, window_bounds = array<i64: 32, 256>}]} {
    %c0 = arith.constant 0 : index
    %c0_0 = arith.constant 0 : index
    %0 = vector.load %arg1[%c0, %c0_0] : memref<4x256xf32, #tpu.memory_space<vmem>>, vector<4x256xf32>
    %1 = math.sin %0 : vector<4x256xf32>
    %2 = math.cos %0 : vector<4x256xf32>
    %3 = tpu.concatenate %0, %1, %2 in 0 : vector<4x256xf32>, vector<4x256xf32>, vector<4x256xf32> -> vector<12x256xf32>
    %cst = arith.constant 0.000000e+00 : f32
    %4 = vector.broadcast %cst : f32 to vector<4x256xf32>
    %5 = tpu.concatenate %3, %4 in 0 : vector<12x256xf32>, vector<4x256xf32> -> vector<16x256xf32>
    %c0_1 = arith.constant 0 : index
    %c0_2 = arith.constant 0 : index
    %6 = vector.load %arg2[%c0_1, %c0_2] : memref<32x16xf32, #tpu.memory_space<vmem>>, vector<32x16xf32>
    %cst_3 = arith.constant dense<0.000000e+00> : vector<32x256xf32>
    %7 = tpu.matmul %6, %5, %cst_3 {dimension_numbers = #tpu.dot_dimension_numbers<[1], [0], [0], [1], [0, 0, 1, 1], [], []>, precision = #tpu.contract_precision<fp32>} : vector<32x16xf32>, vector<16x256xf32>, vector<32x256xf32> -> vector<32x256xf32>
    %c0_4 = arith.constant 0 : index
    %c0_5 = arith.constant 0 : index
    %8 = vector.load %arg3[%c0_4, %c0_5] : memref<32x1xf32, #tpu.memory_space<vmem>>, vector<32x1xf32>
    %9 = vector.broadcast %8 : vector<32x1xf32> to vector<32x256xf32>
    %10 = arith.mulf %7, %9 : vector<32x256xf32>
    %c0_6 = arith.constant 0 : index
    %c0_7 = arith.constant 0 : index
    %11 = vector.load %arg4[%c0_6, %c0_7] : memref<32x1xf32, #tpu.memory_space<vmem>>, vector<32x1xf32>
    %12 = vector.broadcast %11 : vector<32x1xf32> to vector<32x256xf32>
    %13 = arith.addf %10, %12 : vector<32x256xf32>
    %14 = math.sin %13 : vector<32x256xf32>
    %c0_8 = arith.constant 0 : index
    %c0_9 = arith.constant 0 : index
    %15 = vector.load %arg5[%c0_8, %c0_9] : memref<32x256xf32, #tpu.memory_space<vmem>>, vector<32x256xf32>
    tpu.vector_store %arg5[%c0_8, %c0_9], %14 {strides = array<i32>} : memref<32x256xf32, #tpu.memory_space<vmem>>, vector<32x256xf32>,
    return
  }
  func.func @transform_0(%arg0: i32) -> (i32, i32) {
    %c0_i32 = arith.constant 0 : i32
    %c0_i32_0 = arith.constant 0 : i32
    return %c0_i32, %arg0 : i32, i32
  }
  func.func @transform_1(%arg0: i32) -> (i32, i32) {
    %c0_i32 = arith.constant 0 : i32
    %c0_i32_0 = arith.constant 0 : i32
    %c0_i32_1 = arith.constant 0 : i32
    return %c0_i32, %c0_i32_0 : i32, i32
  }
  func.func @transform_2(%arg0: i32) -> (i32, i32) {
    %c0_i32 = arith.constant 0 : i32
    %c0_i32_0 = arith.constant 0 : i32
    %c0_i32_1 = arith.constant 0 : i32
    return %c0_i32, %c0_i32_0 : i32, i32
  }
  func.func @transform_3(%arg0: i32) -> (i32, i32) {
    %c0_i32 = arith.constant 0 : i32
    %c0_i32_0 = arith.constant 0 : i32
    %c0_i32_1 = arith.constant 0 : i32
    return %c0_i32, %c0_i32_0 : i32, i32
  }
  func.func @transform_4(%arg0: i32) -> (i32, i32) {
    %c0_i32 = arith.constant 0 : i32
    %c0_i32_0 = arith.constant 0 : i32
    return %c0_i32, %arg0 : i32, i32
  }
}

</mosaic_0001>

<llo_original>
// kernel: tpu_custom_call.1
$region0: #{tpu_custom_call.1}
  #allocation0 [shape = 'u32[]', space=smem, size = 0x4, offset = 0x4, fixed_abs, tag = 'smem constant byte address 0x4 - core index']
  #allocation1 [shape = 'u32[72,128]{1,0:T(1,128)}', space=vmem, size = 0x9000, scoped, tag = 'internal scratch']
  %s0 = inlined_call_operand.vmem [shape: f32[4,256], index: 0, kind: input, shape index: {}]
  %s1 = inlined_call_operand.vmem [shape: f32[32,16], index: 1, kind: input, shape index: {}]
  %s2 = inlined_call_operand.vmem [shape: f32[32,1], index: 2, kind: input, shape index: {}]
  %s3 = inlined_call_operand.vmem [shape: f32[32,1], index: 3, kind: input, shape index: {}]
  %s4 = inlined_call_operand.hbm [shape: f32[32,256], index: 4, kind: output, shape index: {}]
  %s5 = sld [smem:[#allocation0]]
  $region26: #{tpu_custom_call.1} parent=0
    _
  %s7 = ssub.s32 1, %s5
  %s8 = scalar_select 0, %s7, %s5
  $region1: #{tpu_custom_call.1} parent=0
    #allocation2 [shape = 'u8[32768]{0}', space=vmem, size = 0x8000, scoped, tag = 'output window, operand 0, single buffered']
    #allocation3 [shape = 's32[1]{0}', space=sflag, size = 0x4, scoped, tag = 'scoped memory for tpu_custom_call.1']
    %9 = vsyncpa [#allocation3], 0
    // Predicated region
    $region2: #{tpu_custom_call.1} parent=1 // pred_check
      _
    $region3: #{tpu_custom_call.1} parent=1 // pred_check_branch
      %11 = sbr.rel (0) target = $region5
    $region4: #{tpu_custom_call.1} parent=1 // pred_region
      _
    $region5: #{tpu_custom_call.1} parent=1 // pred_fallthru
      _
    // Predicated region
    $region6: #{tpu_custom_call.1} parent=1 // pred_check
      _
    $region7: #{tpu_custom_call.1} parent=1 // pred_check_branch
      %13 = sbr.rel (0) target = $region9
    $region8: #{tpu_custom_call.1} parent=1 // pred_region
      _
    $region9: #{tpu_custom_call.1} parent=1 // pred_fallthru
      _
    // Predicated region
    $region10: #{tpu_custom_call.1} parent=1 // pred_check
      _
    $region11: #{tpu_custom_call.1} parent=1 // pred_check_branch
      %15 = sbr.rel (0) target = $region13
    $region12: #{tpu_custom_call.1} parent=1 // pred_region
      _
    $region13: #{tpu_custom_call.1} parent=1 // pred_fallthru
      _
    // Predicated region
    $region14: #{tpu_custom_call.1} parent=1 // pred_check
      _
    $region15: #{tpu_custom_call.1} parent=1 // pred_check_branch
      %17 = sbr.rel (0) target = $region17
    $region16: #{tpu_custom_call.1} parent=1 // pred_region
      _
    $region17: #{tpu_custom_call.1} parent=1 // pred_fallthru
      _
    %v18 = vld [vmem:[%s0] sm:$0xff]
    %v19 = vand.u32 2147483647, %v18
    %vm20 = vcmp.le.f32.partialorder %v19, 0.7853982
    %vm21 = vcmp.lt.s32.totalorder %v18, 0
    %v22 = vand.u32 %v18, 2139095040
    %v23 = vshrl.u32 %v22, 23
    %v24 = vsub.s32 %v23, 127
    %v25 = vand.u32 2147483647, %v18
    %v26 = vand.u32 %v25, 8388607
    %v27 = vor.u32 %v26, 8388608
    %v28 = vsub.s32 0, %v27
    %v29 = vadd.s32 %v24, 1
    %vm30 = vcmp.gt.s32.totalorder %v29, 0
    %v31 = vsel %vm30, %v29, 0
    %v32 = vshrl.u32 %v31, 5
    %v33 = vand.u32 %v31, 31
    %v34 = vsub.s32 32, %v33
    %v35 = vshrl.u32 683565275, %v34
    %v36 = vshll.u32 683565275, %v33
    %v37 = vshrl.u32 2475754826, %v34
    %v38 = vor.u32 %v36, %v37
    %v39 = vshll.u32 2475754826, %v33
    %v40 = vshrl.u32 2131351028, %v34
    %v41 = vor.u32 %v39, %v40
    %v42 = vshll.u32 2131351028, %v33
    %v43 = vshrl.u32 2102212464, %v34
    %v44 = vor.u32 %v42, %v43
    %v45 = vshll.u32 2102212464, %v33
    %v46 = vshrl.u32 920167782, %v34
    %v47 = vor.u32 %v45, %v46
    %v48 = vshll.u32 920167782, %v33
    %v49 = vshrl.u32 1326507024, %v34
    %v50 = vor.u32 %v48, %v49
    %vm51 = vcmp.lt.s32.totalorder %v32, 1
    %vm52 = vcmp.lt.s32.totalorder %v32, 2
    %vm53 = vcmp.lt.s32.totalorder %v32, 3
    %vm54 = vcmp.lt.s32.totalorder %v32, 4
    %v55 = vsel %vm51, %v35, %v38
    %v56 = vsel %vm54, %v44, 2102212464
    %v57 = vsel %vm53, %v41, %v56
    %v58 = vsel %vm52, %v55, %v57
    %v59 = vsel %vm51, %v38, %v41
    %v60 = vsel %vm54, %v47, 920167782
    %v61 = vsel %vm53, %v44, %v60
    %v62 = vsel %vm52, %v59, %v61
    %v63 = vsel %vm51, %v41, %v44
    %v64 = vsel %vm54, %v50, 1326507024
    %v65 = vsel %vm53, %v47, %v64
    %v66 = vsel %vm52, %v63, %v65
    %v67 = vshll.u32 %v27, 8
    %v68 = vand.u32 %v67, 65535
    %v69 = vshrl.u32 %v67, 16
    %v70 = vand.u32 %v66, 65535
    %v71 = vshrl.u32 %v66, 16
    %v72 = vmul.u32 %v68, %v70
    %v73 = vmul.u32 %v68, %v71
    %v74 = vmul.u32 %v69, %v70
    %v75 = vmul.u32 %v69, %v71
    %v76 = vshll.u32 %v73, 16
    %v77 = vshrl.u32 %v73, 16
    %v78 = vshll.u32 %v74, 16
    %v79 = vshrl.u32 %v74, 16
    %vm80 = vc.u32 %v72, %v76
    %v81 = vsel %vm80, 1, 0
    %v82 = vadd.s32 %v72, %v76
    %v83 = vadd.s32 %v75, %v81
    %vm84 = vc.u32 %v82, %v78
    %v85 = vsel %vm84, 1, 0
    %v86 = vadd.s32 %v82, %v78
    %v87 = vadd.s32 %v83, %v85
    %v88 = vadd.s32 %v87, %v77
    %v89 = vadd.s32 %v88, %v79
    %v90 = vand.u32 %v67, 65535
    %v91 = vshrl.u32 %v67, 16
    %v92 = vand.u32 %v62, 65535
    %v93 = vshrl.u32 %v62, 16
    %v94 = vmul.u32 %v90, %v92
    %v95 = vmul.u32 %v90, %v93
    %v96 = vmul.u32 %v91, %v92
    %v97 = vmul.u32 %v91, %v93
    %v98 = vshll.u32 %v95, 16
    %v99 = vshrl.u32 %v95, 16
    %v100 = vshll.u32 %v96, 16
    %v101 = vshrl.u32 %v96, 16
    %vm102 = vc.u32 %v94, %v98
    %v103 = vsel %vm102, 1, 0
    %v104 = vadd.s32 %v94, %v98
    %v105 = vadd.s32 %v97, %v103
    %vm106 = vc.u32 %v104, %v100
    %v107 = vsel %vm106, 1, 0
    %v108 = vadd.s32 %v104, %v100
    %v109 = vadd.s32 %v105, %v107
    %v110 = vadd.s32 %v109, %v99
    %v111 = vadd.s32 %v110, %v101
    %v112 = vmul.u32 %v67, %v58
    %v113 = vadd.s32 %v89, %v108
    %vm114 = vc.u32 %v89, %v108
    %v115 = vadd.s32 %v111, 1
    %v116 = vsel %vm114, %v115, %v111
    %v117 = vadd.s32 %v112, %v116
    %v118 = vadd.s32 %v117, 536870912
    %v119 = vshrl.u32 %v118, 30
    %v120 = vshll.u32 %v119, 30
    %v121 = vsub.s32 %v117, %v120
    %vm122 = vcmp.lt.s32.totalorder %v121, 0
    %v123 = vsub.s32 0, %v121
    %v124 = vsel %vm122, %v123, %v121
    %v125 = vclz %v124
    %v126 = vsub.s32 %v125, 2
    %vm127 = vcmp.gt.s32.totalorder 0, %v126
    %v128 = vsel %vm127, 0, %v126
    %v129 = vsub.s32 32, %v128
    %v130 = vshll.u32 %v121, %v128
    %v131 = vshrl.u32 %v113, %v129
    %v132 = vor.u32 %v130, %v131
    %v133 = vsub.s32 4294967266, %v128
    %v134 = vadd.s32 %v133, 127
    %v135 = vshll.u32 %v134, 23
    %v136 = vor.u32 4788187, %v135
    %v137 = vand.u32 2147483647, %v136
    %v139 = vcvt.s32.f32 %v132
    %v140 = vmul.f32 %v139, %v137
    %v141 = vxor.u32 %v140, 2147483648
    %v142 = vsel %vm21, %v141, %v140
    %v143 = vsub.s32 4, %v119
    %v144 = vsel %vm21, %v143, %v119
    %v145 = vsel %vm20, %v18, %v142
    %v146 = vsel %vm20, 0, %v144
    %v147 = vmul.f32 %v145, %v145
    %v148 = vmul.f32 %v147, -0.001358992
    %v149 = vadd.f32 %v148, 0.041655596
    %v150 = vmul.f32 %v147, %v149
    %v151 = vadd.f32 %v150, -0.4999988
    %v152 = vmul.f32 %v147, %v151
    %v153 = vadd.f32 1.0, %v152
    %v154 = vmul.f32 %v145, %v145
    %v155 = vmul.f32 %v154, -0.00019511016
    %v156 = vadd.f32 %v155, 0.008332121
    %v157 = vmul.f32 %v154, %v156
    %v158 = vadd.f32 %v157, -0.16666654
    %v159 = vmul.f32 %v154, %v158
    %v160 = vadd.f32 %v159, 1.0
    %v161 = vmul.f32 %v160, %v145
    %vm162 = vweird.f32 %v18
    %v163 = vadd.s32 %v146, 3
    %v164 = vand.u32 %v163, 3
    %vm165 = vcmp.lt.s32.totalorder %v164, 2
    %vm166 = vcmp.eq.s32.totalorder %v164, 0
    %v167 = vxor.u32 %v161, 2147483648
    %v168 = vsel %vm166, %v153, %v167
    %vm169 = vcmp.eq.s32.totalorder %v164, 2
    %v170 = vxor.u32 %v153, 2147483648
    %v171 = vsel %vm169, %v170, %v161
    %v172 = vsel %vm165, %v168, %v171
    %v173 = vsel %vm162, nan, %v172
    %v174 = vand.u32 2147483647, %v18
    %vm175 = vcmp.le.f32.partialorder %v174, 0.7853982
    %vm176 = vcmp.lt.s32.totalorder %v18, 0
    %v177 = vand.u32 %v18, 2139095040
    %v178 = vshrl.u32 %v177, 23
    %v179 = vsub.s32 %v178, 127
    %v180 = vand.u32 2147483647, %v18
    %v181 = vand.u32 %v180, 8388607
    %v182 = vor.u32 %v181, 8388608
    %v183 = vsub.s32 0, %v182
    %v184 = vadd.s32 %v179, 1
    %vm185 = vcmp.gt.s32.totalorder %v184, 0
    %v186 = vsel %vm185, %v184, 0
    %v187 = vshrl.u32 %v186, 5
    %v188 = vand.u32 %v186, 31
    %v189 = vsub.s32 32, %v188
    %v190 = vshrl.u32 683565275, %v189
    %v191 = vshll.u32 683565275, %v188
    %v192 = vshrl.u32 2475754826, %v189
    %v193 = vor.u32 %v191, %v192
    %v194 = vshll.u32 2475754826, %v188
    %v195 = vshrl.u32 2131351028, %v189
    %v196 = vor.u32 %v194, %v195
    %v197 = vshll.u32 2131351028, %v188
    %v198 = vshrl.u32 2102212464, %v189
    %v199 = vor.u32 %v197, %v198
    %v200 = vshll.u32 2102212464, %v188
    %v201 = vshrl.u32 920167782, %v189
    %v202 = vor.u32 %v200, %v201
    %v203 = vshll.u32 920167782, %v188
    %v204 = vshrl.u32 1326507024, %v189
    %v205 = vor.u32 %v203, %v204
    %vm206 = vcmp.lt.s32.totalorder %v187, 1
    %vm207 = vcmp.lt.s32.totalorder %v187, 2
    %vm208 = vcmp.lt.s32.totalorder %v187, 3
    %vm209 = vcmp.lt.s32.totalorder %v187, 4
    %v210 = vsel %vm206, %v190, %v193
    %v211 = vsel %vm209, %v199, 2102212464
    %v212 = vsel %vm208, %v196, %v211
    %v213 = vsel %vm207, %v210, %v212
    %v214 = vsel %vm206, %v193, %v196
    %v215 = vsel %vm209, %v202, 920167782
    %v216 = vsel %vm208, %v199, %v215
    %v217 = vsel %vm207, %v214, %v216
    %v218 = vsel %vm206, %v196, %v199
    %v219 = vsel %vm209, %v205, 1326507024
    %v220 = vsel %vm208, %v202, %v219
    %v221 = vsel %vm207, %v218, %v220
    %v222 = vshll.u32 %v182, 8
    %v223 = vand.u32 %v222, 65535
    %v224 = vshrl.u32 %v222, 16
    %v225 = vand.u32 %v221, 65535
    %v226 = vshrl.u32 %v221, 16
    %v227 = vmul.u32 %v223, %v225
    %v228 = vmul.u32 %v223, %v226
    %v229 = vmul.u32 %v224, %v225
    %v230 = vmul.u32 %v224, %v226
    %v231 = vshll.u32 %v228, 16
    %v232 = vshrl.u32 %v228, 16
    %v233 = vshll.u32 %v229, 16
    %v234 = vshrl.u32 %v229, 16
    %vm235 = vc.u32 %v227, %v231
    %v236 = vsel %vm235, 1, 0
    %v237 = vadd.s32 %v227, %v231
    %v238 = vadd.s32 %v230, %v236
    %vm239 = vc.u32 %v237, %v233
    %v240 = vsel %vm239, 1, 0
    %v241 = vadd.s32 %v237, %v233
    %v242 = vadd.s32 %v238, %v240
    %v243 = vadd.s32 %v242, %v232
    %v244 = vadd.s32 %v243, %v234
    %v245 = vand.u32 %v222, 65535
    %v246 = vshrl.u32 %v222, 16
    %v247 = vand.u32 %v217, 65535
    %v248 = vshrl.u32 %v217, 16
    %v249 = vmul.u32 %v245, %v247
    %v250 = vmul.u32 %v245, %v248
    %v251 = vmul.u32 %v246, %v247
    %v252 = vmul.u32 %v246, %v248
    %v253 = vshll.u32 %v250, 16
    %v254 = vshrl.u32 %v250, 16
    %v255 = vshll.u32 %v251, 16
    %v256 = vshrl.u32 %v251, 16
    %vm257 = vc.u32 %v249, %v253
    %v258 = vsel %vm257, 1, 0
    %v259 = vadd.s32 %v249, %v253
    %v260 = vadd.s32 %v252, %v258
    %vm261 = vc.u32 %v259, %v255
    %v262 = vsel %vm261, 1, 0
    %v263 = vadd.s32 %v259, %v255
    %v264 = vadd.s32 %v260, %v262
    %v265 = vadd.s32 %v264, %v254
    %v266 = vadd.s32 %v265, %v256
    %v267 = vmul.u32 %v222, %v213
    %v268 = vadd.s32 %v244, %v263
    %vm269 = vc.u32 %v244, %v263
    %v270 = vadd.s32 %v266, 1
    %v271 = vsel %vm269, %v270, %v266
    %v272 = vadd.s32 %v267, %v271
    %v273 = vadd.s32 %v272, 536870912
    %v274 = vshrl.u32 %v273, 30
    %v275 = vshll.u32 %v274, 30
    %v276 = vsub.s32 %v272, %v275
    %vm277 = vcmp.lt.s32.totalorder %v276, 0
    %v278 = vsub.s32 0, %v276
    %v279 = vsel %vm277, %v278, %v276
    %v280 = vclz %v279
    %v281 = vsub.s32 %v280, 2
    %vm282 = vcmp.gt.s32.totalorder 0, %v281
    %v283 = vsel %vm282, 0, %v281
    %v284 = vsub.s32 32, %v283
    %v285 = vshll.u32 %v276, %v283
    %v286 = vshrl.u32 %v268, %v284
    %v287 = vor.u32 %v285, %v286
    %v288 = vsub.s32 4294967266, %v283
    %v289 = vadd.s32 %v288, 127
    %v290 = vshll.u32 %v289, 23
    %v291 = vor.u32 4788187, %v290
    %v292 = vand.u32 2147483647, %v291
    %v294 = vcvt.s32.f32 %v287
    %v295 = vmul.f32 %v294, %v292
    %v296 = vxor.u32 %v295, 2147483648
    %v297 = vsel %vm176, %v296, %v295
    %v298 = vsub.s32 4, %v274
    %v299 = vsel %vm176, %v298, %v274
    %v300 = vsel %vm175, %v18, %v297
    %v301 = vsel %vm175, 0, %v299
    %v302 = vmul.f32 %v300, %v300
    %v303 = vmul.f32 %v302, -0.001358992
    %v304 = vadd.f32 %v303, 0.041655596
    %v305 = vmul.f32 %v302, %v304
    %v306 = vadd.f32 %v305, -0.4999988
    %v307 = vmul.f32 %v302, %v306
    %v308 = vadd.f32 1.0, %v307
    %v309 = vmul.f32 %v300, %v300
    %v310 = vmul.f32 %v309, -0.00019511016
    %v311 = vadd.f32 %v310, 0.008332121
    %v312 = vmul.f32 %v309, %v311
    %v313 = vadd.f32 %v312, -0.16666654
    %v314 = vmul.f32 %v309, %v313
    %v315 = vadd.f32 %v314, 1.0
    %v316 = vmul.f32 %v315, %v300
    %vm317 = vweird.f32 %v18
    %v318 = vand.u32 %v301, 3
    %vm319 = vcmp.lt.s32.totalorder %v318, 2
    %vm320 = vcmp.eq.s32.totalorder %v318, 0
    %v321 = vxor.u32 %v316, 2147483648
    %v322 = vsel %vm320, %v308, %v321
    %vm323 = vcmp.eq.s32.totalorder %v318, 2
    %v324 = vxor.u32 %v308, 2147483648
    %v325 = vsel %vm323, %v324, %v316
    %v326 = vsel %vm319, %v322, %v325
    %v327 = vsel %vm317, nan, %v326
    %329 = vst [vmem:[#allocation1] ss:$2 sm:$0xff] %v18
    %v330 = vld.sshfl [vmem:[#allocation1] sm:$0xff pattern:$0x75316420]
    %v331 = vld.sshfl [vmem:[#allocation1 + $0x8] sm:$0xff pattern:$0x75316420]
    %s335 = scalar_lea.vmem [#allocation1], 1
    %336 = vst [vmem:[%s335] ss:$2 sm:$0xff] %v173
    %v337 = vld.sshfl [vmem:[#allocation1] sm:$0xff pattern:$0x75316420]
    %v338 = vld.sshfl [vmem:[#allocation1 + $0x8] sm:$0xff pattern:$0x75316420]
    %342 = vst [vmem:[#allocation1] ss:$2 sm:$0xff] %v327
    %v343 = vld.sshfl [vmem:[#allocation1] sm:$0xff pattern:$0x75316420]
    %v344 = vld.sshfl [vmem:[#allocation1 + $0x8] sm:$0xff pattern:$0x75316420]
    %vm347 = vcmask 1043456
    %v348 = vsel %vm347, %v330, %v337
    %v349 = vsel %vm347, %v331, %v338
    %v350 = vsel %vm347, %v343, 0.0
    %v351 = vsel %vm347, %v344, 0.0
    %v352 = vld [vmem:[%s1] sm:$0xff]
    %v353 = vld [vmem:[%s1 + $0x8] sm:$0xff]
    %v354 = vld [vmem:[%s1 + $0x10] sm:$0xff]
    %v355 = vld [vmem:[%s1 + $0x18] sm:$0xff]
    %vm356 = vcmask 130048
    %v358 = vsel %vm356, %v352, 0
    %v361 = vsel %vm356, %v353, 0
    %v364 = vsel %vm356, %v354, 0
    %v367 = vsel %vm356, %v355, 0
    %369 = vmatpush.msra.mxu0 0.0
    %370 = vmatpush.msra.mxu0 0.0
    %371 = vmatpush.msra.mxu0 0.0
    %372 = vmatpush.msra.mxu0 0.0
    %373 = vmatpush.msra.mxu0 0.0
    %374 = vmatpush.msra.mxu0 0.0
    %375 = vmatpush.msra.mxu0 0.0
    %376 = vmatpush.msra.mxu0 0.0
    %377 = vmatpush.msra.mxu0 0.0
    %378 = vmatpush.msra.mxu0 0.0
    %379 = vmatpush.msra.mxu0 0.0
    %380 = vmatpush.msra.mxu0 0.0
    %381 = vmatpush.msra.mxu0 0.0
    %382 = vmatpush.msra.mxu0 0.0
    %v383 = vand.u32 %v350, 4294901760
    %384 = vmatpush.msra.mxu0 %v383
    %v385 = vand.u32 %v348, 4294901760
    %386 = vmatpush.msra.mxu0 %v385
    %v387 = vand.u32 %v358, 4294901760
    %v388 = vsub.f32 %v358, %v387
    %v389 = vand.u32 %v388, 4294901760
    %v390 = vsub.f32 %v388, %v389
    %v391 = vand.u32 %v390, 4294901760
    %392 = vmatmul.f32.gmra.mxu0 %v391
    %v393 = vpop.f32.mrf.mxu0
    %v394 = vadd.f32 0.0, %v393
    %v395 = vand.u32 %v361, 4294901760
    %v396 = vsub.f32 %v361, %v395
    %v397 = vand.u32 %v396, 4294901760
    %v398 = vsub.f32 %v396, %v397
    %v399 = vand.u32 %v398, 4294901760
    %400 = vmatmul.f32.gmra.mxu0 %v399
    %v401 = vpop.f32.mrf.mxu0
    %v402 = vadd.f32 0.0, %v401
    %v403 = vand.u32 %v364, 4294901760
    %v404 = vsub.f32 %v364, %v403
    %v405 = vand.u32 %v404, 4294901760
    %v406 = vsub.f32 %v404, %v405
    %v407 = vand.u32 %v406, 4294901760
    %408 = vmatmul.f32.gmra.mxu0 %v407
    %v409 = vpop.f32.mrf.mxu0
    %v410 = vadd.f32 0.0, %v409
    %v411 = vand.u32 %v367, 4294901760
    %v412 = vsub.f32 %v367, %v411
    %v413 = vand.u32 %v412, 4294901760
    %v414 = vsub.f32 %v412, %v413
    %v415 = vand.u32 %v414, 4294901760
    %416 = vmatmul.f32.gmra.mxu0 %v415
    %v417 = vpop.f32.mrf.mxu0
    %v418 = vadd.f32 0.0, %v417
    %419 = vdwg.mxu0
    %420 = vmatpush.msra.mxu0 0.0
    %421 = vmatpush.msra.mxu0 0.0
    %422 = vmatpush.msra.mxu0 0.0
    %423 = vmatpush.msra.mxu0 0.0
    %424 = vmatpush.msra.mxu0 0.0
    %425 = vmatpush.msra.mxu0 0.0
    %426 = vmatpush.msra.mxu0 0.0
    %427 = vmatpush.msra.mxu0 0.0
    %428 = vmatpush.msra.mxu0 0.0
    %429 = vmatpush.msra.mxu0 0.0
    %430 = vmatpush.msra.mxu0 0.0
    %431 = vmatpush.msra.mxu0 0.0
    %432 = vmatpush.msra.mxu0 0.0
    %433 = vmatpush.msra.mxu0 0.0
    %v434 = vand.u32 %v350, 4294901760
    %v435 = vsub.f32 %v350, %v434
    %v436 = vand.u32 %v435, 4294901760
    %v437 = vsub.f32 %v435, %v436
    %v438 = vand.u32 %v437, 4294901760
    %439 = vmatpush.msra.mxu0 %v438
    %v440 = vand.u32 %v348, 4294901760
    %v441 = vsub.f32 %v348, %v440
    %v442 = vand.u32 %v441, 4294901760
    %v443 = vsub.f32 %v441, %v442
    %v444 = vand.u32 %v443, 4294901760
    %445 = vmatpush.msra.mxu0 %v444
    %v446 = vand.u32 %v358, 4294901760
    %447 = vmatmul.f32.gmra.mxu0 %v446
    %v448 = vpop.f32.mrf.mxu0
    %v449 = vadd.f32 %v394, %v448
    %v450 = vand.u32 %v361, 4294901760
    %451 = vmatmul.f32.gmra.mxu0 %v450
    %v452 = vpop.f32.mrf.mxu0
    %v453 = vadd.f32 %v402, %v452
    %v454 = vand.u32 %v364, 4294901760
    %455 = vmatmul.f32.gmra.mxu0 %v454
    %v456 = vpop.f32.mrf.mxu0
    %v457 = vadd.f32 %v410, %v456
    %v458 = vand.u32 %v367, 4294901760
    %459 = vmatmul.f32.gmra.mxu0 %v458
    %v460 = vpop.f32.mrf.mxu0
    %v461 = vadd.f32 %v418, %v460
    %462 = vdwg.mxu0
    %463 = vmatpush.msra.mxu0 0.0
    %464 = vmatpush.msra.mxu0 0.0
    %465 = vmatpush.msra.mxu0 0.0
    %466 = vmatpush.msra.mxu0 0.0
    %467 = vmatpush.msra.mxu0 0.0
    %468 = vmatpush.msra.mxu0 0.0
    %469 = vmatpush.msra.mxu0 0.0
    %470 = vmatpush.msra.mxu0 0.0
    %471 = vmatpush.msra.mxu0 0.0
    %472 = vmatpush.msra.mxu0 0.0
    %473 = vmatpush.msra.mxu0 0.0
    %474 = vmatpush.msra.mxu0 0.0
    %475 = vmatpush.msra.mxu0 0.0
    %476 = vmatpush.msra.mxu0 0.0
    %v477 = vand.u32 %v350, 4294901760
    %v478 = vsub.f32 %v350, %v477
    %479 = vmatpush.msra.mxu0 %v478
    %v480 = vand.u32 %v348, 4294901760
    %v481 = vsub.f32 %v348, %v480
    %482 = vmatpush.msra.mxu0 %v481
    %v483 = vand.u32 %v358, 4294901760
    %v484 = vsub.f32 %v358, %v483
    %485 = vmatmul.f32.gmra.mxu0 %v484
    %v486 = vpop.f32.mrf.mxu0
    %v487 = vadd.f32 %v449, %v486
    %v488 = vand.u32 %v361, 4294901760
    %v489 = vsub.f32 %v361, %v488
    %490 = vmatmul.f32.gmra.mxu0 %v489
    %v491 = vpop.f32.mrf.mxu0
    %v492 = vadd.f32 %v453, %v491
    %v493 = vand.u32 %v364, 4294901760
    %v494 = vsub.f32 %v364, %v493
    %495 = vmatmul.f32.gmra.mxu0 %v494
    %v496 = vpop.f32.mrf.mxu0
    %v497 = vadd.f32 %v457, %v496
    %v498 = vand.u32 %v367, 4294901760
    %v499 = vsub.f32 %v367, %v498
    %500 = vmatmul.f32.gmra.mxu0 %v499
    %v501 = vpop.f32.mrf.mxu0
    %v502 = vadd.f32 %v461, %v501
    %503 = vdwg.mxu0
    %504 = vmatpush.msra.mxu0 0.0
    %505 = vmatpush.msra.mxu0 0.0
    %506 = vmatpush.msra.mxu0 0.0
    %507 = vmatpush.msra.mxu0 0.0
    %508 = vmatpush.msra.mxu0 0.0
    %509 = vmatpush.msra.mxu0 0.0
    %510 = vmatpush.msra.mxu0 0.0
    %511 = vmatpush.msra.mxu0 0.0
    %512 = vmatpush.msra.mxu0 0.0
    %513 = vmatpush.msra.mxu0 0.0
    %514 = vmatpush.msra.mxu0 0.0
    %515 = vmatpush.msra.mxu0 0.0
    %516 = vmatpush.msra.mxu0 0.0
    %517 = vmatpush.msra.mxu0 0.0
    %v518 = vand.u32 %v350, 4294901760
    %519 = vmatpush.msra.mxu0 %v518
    %v520 = vand.u32 %v348, 4294901760
    %521 = vmatpush.msra.mxu0 %v520
    %v522 = vand.u32 %v358, 4294901760
    %v523 = vsub.f32 %v358, %v522
    %v524 = vand.u32 %v523, 4294901760
    %525 = vmatmul.f32.gmra.mxu0 %v524
    %v526 = vpop.f32.mrf.mxu0
    %v527 = vadd.f32 %v487, %v526
    %v528 = vand.u32 %v361, 4294901760
    %v529 = vsub.f32 %v361, %v528
    %v530 = vand.u32 %v529, 4294901760
    %531 = vmatmul.f32.gmra.mxu0 %v530
    %v532 = vpop.f32.mrf.mxu0
    %v533 = vadd.f32 %v492, %v532
    %v534 = vand.u32 %v364, 4294901760
    %v535 = vsub.f32 %v364, %v534
    %v536 = vand.u32 %v535, 4294901760
    %537 = vmatmul.f32.gmra.mxu0 %v536
    %v538 = vpop.f32.mrf.mxu0
    %v539 = vadd.f32 %v497, %v538
    %v540 = vand.u32 %v367, 4294901760
    %v541 = vsub.f32 %v367, %v540
    %v542 = vand.u32 %v541, 4294901760
    %543 = vmatmul.f32.gmra.mxu0 %v542
    %v544 = vpop.f32.mrf.mxu0
    %v545 = vadd.f32 %v502, %v544
    %546 = vdwg.mxu0
    %547 = vmatpush.msra.mxu0 0.0
    %548 = vmatpush.msra.mxu0 0.0
    %549 = vmatpush.msra.mxu0 0.0
    %550 = vmatpush.msra.mxu0 0.0
    %551 = vmatpush.msra.mxu0 0.0
    %552 = vmatpush.msra.mxu0 0.0
    %553 = vmatpush.msra.mxu0 0.0
    %554 = vmatpush.msra.mxu0 0.0
    %555 = vmatpush.msra.mxu0 0.0
    %556 = vmatpush.msra.mxu0 0.0
    %557 = vmatpush.msra.mxu0 0.0
    %558 = vmatpush.msra.mxu0 0.0
    %559 = vmatpush.msra.mxu0 0.0
    %560 = vmatpush.msra.mxu0 0.0
    %v561 = vand.u32 %v350, 4294901760
    %v562 = vsub.f32 %v350, %v561
    %v563 = vand.u32 %v562, 4294901760
    %564 = vmatpush.msra.mxu0 %v563
    %v565 = vand.u32 %v348, 4294901760
    %v566 = vsub.f32 %v348, %v565
    %v567 = vand.u32 %v566, 4294901760
    %568 = vmatpush.msra.mxu0 %v567
    %v569 = vand.u32 %v358, 4294901760
    %570 = vmatmul.f32.gmra.mxu0 %v569
    %v571 = vpop.f32.mrf.mxu0
    %v572 = vadd.f32 %v527, %v571
    %v573 = vand.u32 %v361, 4294901760
    %574 = vmatmul.f32.gmra.mxu0 %v573
    %v575 = vpop.f32.mrf.mxu0
    %v576 = vadd.f32 %v533, %v575
    %v577 = vand.u32 %v364, 4294901760
    %578 = vmatmul.f32.gmra.mxu0 %v577
    %v579 = vpop.f32.mrf.mxu0
    %v580 = vadd.f32 %v539, %v579
    %v581 = vand.u32 %v367, 4294901760
    %582 = vmatmul.f32.gmra.mxu0 %v581
    %v583 = vpop.f32.mrf.mxu0
    %v584 = vadd.f32 %v545, %v583
    %585 = vdwg.mxu0
    %586 = vmatpush.msra.mxu0 0.0
    %587 = vmatpush.msra.mxu0 0.0
    %588 = vmatpush.msra.mxu0 0.0
    %589 = vmatpush.msra.mxu0 0.0
    %590 = vmatpush.msra.mxu0 0.0
    %591 = vmatpush.msra.mxu0 0.0
    %592 = vmatpush.msra.mxu0 0.0
    %593 = vmatpush.msra.mxu0 0.0
    %594 = vmatpush.msra.mxu0 0.0
    %595 = vmatpush.msra.mxu0 0.0
    %596 = vmatpush.msra.mxu0 0.0
    %597 = vmatpush.msra.mxu0 0.0
    %598 = vmatpush.msra.mxu0 0.0
    %599 = vmatpush.msra.mxu0 0.0
    %v600 = vand.u32 %v350, 4294901760
    %601 = vmatpush.msra.mxu0 %v600
    %v602 = vand.u32 %v348, 4294901760
    %603 = vmatpush.msra.mxu0 %v602
    %v604 = vand.u32 %v358, 4294901760
    %605 = vmatmul.f32.gmra.mxu0 %v604
    %v606 = vpop.f32.mrf.mxu0
    %v607 = vadd.f32 %v572, %v606
    %v608 = vand.u32 %v361, 4294901760
    %609 = vmatmul.f32.gmra.mxu0 %v608
    %v610 = vpop.f32.mrf.mxu0
    %v611 = vadd.f32 %v576, %v610
    %v612 = vand.u32 %v364, 4294901760
    %613 = vmatmul.f32.gmra.mxu0 %v612
    %v614 = vpop.f32.mrf.mxu0
    %v615 = vadd.f32 %v580, %v614
    %v616 = vand.u32 %v367, 4294901760
    %617 = vmatmul.f32.gmra.mxu0 %v616
    %v618 = vpop.f32.mrf.mxu0
    %v619 = vadd.f32 %v584, %v618
    %620 = vdwg.mxu0
    %621 = vmatpush.msra.mxu0 0.0
    %622 = vmatpush.msra.mxu0 0.0
    %623 = vmatpush.msra.mxu0 0.0
    %624 = vmatpush.msra.mxu0 0.0
    %625 = vmatpush.msra.mxu0 0.0
    %626 = vmatpush.msra.mxu0 0.0
    %627 = vmatpush.msra.mxu0 0.0
    %628 = vmatpush.msra.mxu0 0.0
    %629 = vmatpush.msra.mxu0 0.0
    %630 = vmatpush.msra.mxu0 0.0
    %631 = vmatpush.msra.mxu0 0.0
    %632 = vmatpush.msra.mxu0 0.0
    %633 = vmatpush.msra.mxu0 0.0
    %634 = vmatpush.msra.mxu0 0.0
    %v635 = vand.u32 %v351, 4294901760
    %636 = vmatpush.msra.mxu0 %v635
    %v637 = vand.u32 %v349, 4294901760
    %638 = vmatpush.msra.mxu0 %v637
    %v639 = vand.u32 %v358, 4294901760
    %v640 = vsub.f32 %v358, %v639
    %v641 = vand.u32 %v640, 4294901760
    %v642 = vsub.f32 %v640, %v641
    %v643 = vand.u32 %v642, 4294901760
    %644 = vmatmul.f32.gmra.mxu0 %v643
    %v645 = vpop.f32.mrf.mxu0
    %v646 = vadd.f32 0.0, %v645
    %v647 = vand.u32 %v361, 4294901760
    %v648 = vsub.f32 %v361, %v647
    %v649 = vand.u32 %v648, 4294901760
    %v650 = vsub.f32 %v648, %v649
    %v651 = vand.u32 %v650, 4294901760
    %652 = vmatmul.f32.gmra.mxu0 %v651
    %v653 = vpop.f32.mrf.mxu0
    %v654 = vadd.f32 0.0, %v653
    %v655 = vand.u32 %v364, 4294901760
    %v656 = vsub.f32 %v364, %v655
    %v657 = vand.u32 %v656, 4294901760
    %v658 = vsub.f32 %v656, %v657
    %v659 = vand.u32 %v658, 4294901760
    %660 = vmatmul.f32.gmra.mxu0 %v659
    %v661 = vpop.f32.mrf.mxu0
    %v662 = vadd.f32 0.0, %v661
    %v663 = vand.u32 %v367, 4294901760
    %v664 = vsub.f32 %v367, %v663
    %v665 = vand.u32 %v664, 4294901760
    %v666 = vsub.f32 %v664, %v665
    %v667 = vand.u32 %v666, 4294901760
    %668 = vmatmul.f32.gmra.mxu0 %v667
    %v669 = vpop.f32.mrf.mxu0
    %v670 = vadd.f32 0.0, %v669
    %671 = vdwg.mxu0
    %672 = vmatpush.msra.mxu0 0.0
    %673 = vmatpush.msra.mxu0 0.0
    %674 = vmatpush.msra.mxu0 0.0
    %675 = vmatpush.msra.mxu0 0.0
    %676 = vmatpush.msra.mxu0 0.0
    %677 = vmatpush.msra.mxu0 0.0
    %678 = vmatpush.msra.mxu0 0.0
    %679 = vmatpush.msra.mxu0 0.0
    %680 = vmatpush.msra.mxu0 0.0
    %681 = vmatpush.msra.mxu0 0.0
    %682 = vmatpush.msra.mxu0 0.0
    %683 = vmatpush.msra.mxu0 0.0
    %684 = vmatpush.msra.mxu0 0.0
    %685 = vmatpush.msra.mxu0 0.0
    %v686 = vand.u32 %v351, 4294901760
    %v687 = vsub.f32 %v351, %v686
    %v688 = vand.u32 %v687, 4294901760
    %v689 = vsub.f32 %v687, %v688
    %v690 = vand.u32 %v689, 4294901760
    %691 = vmatpush.msra.mxu0 %v690
    %v692 = vand.u32 %v349, 4294901760
    %v693 = vsub.f32 %v349, %v692
    %v694 = vand.u32 %v693, 4294901760
    %v695 = vsub.f32 %v693, %v694
    %v696 = vand.u32 %v695, 4294901760
    %697 = vmatpush.msra.mxu0 %v696
    %v698 = vand.u32 %v358, 4294901760
    %699 = vmatmul.f32.gmra.mxu0 %v698
    %v700 = vpop.f32.mrf.mxu0
    %v701 = vadd.f32 %v646, %v700
    %v702 = vand.u32 %v361, 4294901760
    %703 = vmatmul.f32.gmra.mxu0 %v702
    %v704 = vpop.f32.mrf.mxu0
    %v705 = vadd.f32 %v654, %v704
    %v706 = vand.u32 %v364, 4294901760
    %707 = vmatmul.f32.gmra.mxu0 %v706
    %v708 = vpop.f32.mrf.mxu0
    %v709 = vadd.f32 %v662, %v708
    %v710 = vand.u32 %v367, 4294901760
    %711 = vmatmul.f32.gmra.mxu0 %v710
    %v712 = vpop.f32.mrf.mxu0
    %v713 = vadd.f32 %v670, %v712
    %714 = vdwg.mxu0
    %715 = vmatpush.msra.mxu0 0.0
    %716 = vmatpush.msra.mxu0 0.0
    %717 = vmatpush.msra.mxu0 0.0
    %718 = vmatpush.msra.mxu0 0.0
    %719 = vmatpush.msra.mxu0 0.0
    %720 = vmatpush.msra.mxu0 0.0
    %721 = vmatpush.msra.mxu0 0.0
    %722 = vmatpush.msra.mxu0 0.0
    %723 = vmatpush.msra.mxu0 0.0
    %724 = vmatpush.msra.mxu0 0.0
    %725 = vmatpush.msra.mxu0 0.0
    %726 = vmatpush.msra.mxu0 0.0
    %727 = vmatpush.msra.mxu0 0.0
    %728 = vmatpush.msra.mxu0 0.0
    %v729 = vand.u32 %v351, 4294901760
    %v730 = vsub.f32 %v351, %v729
    %731 = vmatpush.msra.mxu0 %v730
    %v732 = vand.u32 %v349, 4294901760
    %v733 = vsub.f32 %v349, %v732
    %734 = vmatpush.msra.mxu0 %v733
    %v735 = vand.u32 %v358, 4294901760
    %v736 = vsub.f32 %v358, %v735
    %737 = vmatmul.f32.gmra.mxu0 %v736
    %v738 = vpop.f32.mrf.mxu0
    %v739 = vadd.f32 %v701, %v738
    %v740 = vand.u32 %v361, 4294901760
    %v741 = vsub.f32 %v361, %v740
    %742 = vmatmul.f32.gmra.mxu0 %v741
    %v743 = vpop.f32.mrf.mxu0
    %v744 = vadd.f32 %v705, %v743
    %v745 = vand.u32 %v364, 4294901760
    %v746 = vsub.f32 %v364, %v745
    %747 = vmatmul.f32.gmra.mxu0 %v746
    %v748 = vpop.f32.mrf.mxu0
    %v749 = vadd.f32 %v709, %v748
    %v750 = vand.u32 %v367, 4294901760
    %v751 = vsub.f32 %v367, %v750
    %752 = vmatmul.f32.gmra.mxu0 %v751
    %v753 = vpop.f32.mrf.mxu0
    %v754 = vadd.f32 %v713, %v753
    %755 = vdwg.mxu0
    %756 = vmatpush.msra.mxu0 0.0
    %757 = vmatpush.msra.mxu0 0.0
    %758 = vmatpush.msra.mxu0 0.0
    %759 = vmatpush.msra.mxu0 0.0
    %760 = vmatpush.msra.mxu0 0.0
    %761 = vmatpush.msra.mxu0 0.0
    %762 = vmatpush.msra.mxu0 0.0
    %763 = vmatpush.msra.mxu0 0.0
    %764 = vmatpush.msra.mxu0 0.0
    %765 = vmatpush.msra.mxu0 0.0
    %766 = vmatpush.msra.mxu0 0.0
    %767 = vmatpush.msra.mxu0 0.0
    %768 = vmatpush.msra.mxu0 0.0
    %769 = vmatpush.msra.mxu0 0.0
    %v770 = vand.u32 %v351, 4294901760
    %771 = vmatpush.msra.mxu0 %v770
    %v772 = vand.u32 %v349, 4294901760
    %773 = vmatpush.msra.mxu0 %v772
    %v774 = vand.u32 %v358, 4294901760
    %v775 = vsub.f32 %v358, %v774
    %v776 = vand.u32 %v775, 4294901760
    %777 = vmatmul.f32.gmra.mxu0 %v776
    %v778 = vpop.f32.mrf.mxu0
    %v779 = vadd.f32 %v739, %v778
    %v780 = vand.u32 %v361, 4294901760
    %v781 = vsub.f32 %v361, %v780
    %v782 = vand.u32 %v781, 4294901760
    %783 = vmatmul.f32.gmra.mxu0 %v782
    %v784 = vpop.f32.mrf.mxu0
    %v785 = vadd.f32 %v744, %v784
    %v786 = vand.u32 %v364, 4294901760
    %v787 = vsub.f32 %v364, %v786
    %v788 = vand.u32 %v787, 4294901760
    %789 = vmatmul.f32.gmra.mxu0 %v788
    %v790 = vpop.f32.mrf.mxu0
    %v791 = vadd.f32 %v749, %v790
    %v792 = vand.u32 %v367, 4294901760
    %v793 = vsub.f32 %v367, %v792
    %v794 = vand.u32 %v793, 4294901760
    %795 = vmatmul.f32.gmra.mxu0 %v794
    %v796 = vpop.f32.mrf.mxu0
    %v797 = vadd.f32 %v754, %v796
    %798 = vdwg.mxu0
    %799 = vmatpush.msra.mxu0 0.0
    %800 = vmatpush.msra.mxu0 0.0
    %801 = vmatpush.msra.mxu0 0.0
    %802 = vmatpush.msra.mxu0 0.0
    %803 = vmatpush.msra.mxu0 0.0
    %804 = vmatpush.msra.mxu0 0.0
    %805 = vmatpush.msra.mxu0 0.0
    %806 = vmatpush.msra.mxu0 0.0
    %807 = vmatpush.msra.mxu0 0.0
    %808 = vmatpush.msra.mxu0 0.0
    %809 = vmatpush.msra.mxu0 0.0
    %810 = vmatpush.msra.mxu0 0.0
    %811 = vmatpush.msra.mxu0 0.0
    %812 = vmatpush.msra.mxu0 0.0
    %v813 = vand.u32 %v351, 4294901760
    %v814 = vsub.f32 %v351, %v813
    %v815 = vand.u32 %v814, 4294901760
    %816 = vmatpush.msra.mxu0 %v815
    %v817 = vand.u32 %v349, 4294901760
    %v818 = vsub.f32 %v349, %v817
    %v819 = vand.u32 %v818, 4294901760
    %820 = vmatpush.msra.mxu0 %v819
    %v821 = vand.u32 %v358, 4294901760
    %822 = vmatmul.f32.gmra.mxu0 %v821
    %v823 = vpop.f32.mrf.mxu0
    %v824 = vadd.f32 %v779, %v823
    %v825 = vand.u32 %v361, 4294901760
    %826 = vmatmul.f32.gmra.mxu0 %v825
    %v827 = vpop.f32.mrf.mxu0
    %v828 = vadd.f32 %v785, %v827
    %v829 = vand.u32 %v364, 4294901760
    %830 = vmatmul.f32.gmra.mxu0 %v829
    %v831 = vpop.f32.mrf.mxu0
    %v832 = vadd.f32 %v791, %v831
    %v833 = vand.u32 %v367, 4294901760
    %834 = vmatmul.f32.gmra.mxu0 %v833
    %v835 = vpop.f32.mrf.mxu0
    %v836 = vadd.f32 %v797, %v835
    %837 = vdwg.mxu0
    %838 = vmatpush.msra.mxu0 0.0
    %839 = vmatpush.msra.mxu0 0.0
    %840 = vmatpush.msra.mxu0 0.0
    %841 = vmatpush.msra.mxu0 0.0
    %842 = vmatpush.msra.mxu0 0.0
    %843 = vmatpush.msra.mxu0 0.0
    %844 = vmatpush.msra.mxu0 0.0
    %845 = vmatpush.msra.mxu0 0.0
    %846 = vmatpush.msra.mxu0 0.0
    %847 = vmatpush.msra.mxu0 0.0
    %848 = vmatpush.msra.mxu0 0.0
    %849 = vmatpush.msra.mxu0 0.0
    %850 = vmatpush.msra.mxu0 0.0
    %851 = vmatpush.msra.mxu0 0.0
    %v852 = vand.u32 %v351, 4294901760
    %853 = vmatpush.msra.mxu0 %v852
    %v854 = vand.u32 %v349, 4294901760
    %855 = vmatpush.msra.mxu0 %v854
    %v856 = vand.u32 %v358, 4294901760
    %857 = vmatmul.f32.gmra.mxu0 %v856
    %v858 = vpop.f32.mrf.mxu0
    %v859 = vadd.f32 %v824, %v858
    %v860 = vand.u32 %v361, 4294901760
    %861 = vmatmul.f32.gmra.mxu0 %v860
    %v862 = vpop.f32.mrf.mxu0
    %v863 = vadd.f32 %v828, %v862
    %v864 = vand.u32 %v364, 4294901760
    %865 = vmatmul.f32.gmra.mxu0 %v864
    %v866 = vpop.f32.mrf.mxu0
    %v867 = vadd.f32 %v832, %v866
    %v868 = vand.u32 %v367, 4294901760
    %869 = vmatmul.f32.gmra.mxu0 %v868
    %v870 = vpop.f32.mrf.mxu0
    %v871 = vadd.f32 %v836, %v870
    %872 = vdwg.mxu0
    %v873 = vld [vmem:[%s2] sm:$0xff]
    %v874 = vld [vmem:[%s2 + $0x8] sm:$0xff]
    %v875 = vld [vmem:[%s2 + $0x10] sm:$0xff]
    %v876 = vld [vmem:[%s2 + $0x18] sm:$0xff]
    %878 = vset.pattern.permute.xlu0 0
    %879 = vperm.xlu0 %878, %v873
    %v880 = vpop.permute.xlu0 %879
    %883 = vset.pattern.permute.xlu0 0
    %884 = vperm.xlu0 %883, %v874
    %v885 = vpop.permute.xlu0 %884
    %888 = vset.pattern.permute.xlu0 0
    %889 = vperm.xlu0 %888, %v875
    %v890 = vpop.permute.xlu0 %889
    %893 = vset.pattern.permute.xlu0 0
    %894 = vperm.xlu0 %893, %v876
    %v895 = vpop.permute.xlu0 %894
    %v897 = vmul.f32 %v607, %v880
    %v898 = vmul.f32 %v859, %v880
    %v899 = vmul.f32 %v611, %v885
    %v900 = vmul.f32 %v863, %v885
    %v901 = vmul.f32 %v615, %v890
    %v902 = vmul.f32 %v867, %v890
    %v903 = vmul.f32 %v619, %v895
    %v904 = vmul.f32 %v871, %v895
    %v905 = vld [vmem:[%s3] sm:$0xff]
    %v906 = vld [vmem:[%s3 + $0x8] sm:$0xff]
    %v907 = vld [vmem:[%s3 + $0x10] sm:$0xff]
    %v908 = vld [vmem:[%s3 + $0x18] sm:$0xff]
    %910 = vset.pattern.permute.xlu0 0
    %911 = vperm.xlu0 %910, %v905
    %v912 = vpop.permute.xlu0 %911
    %915 = vset.pattern.permute.xlu0 0
    %916 = vperm.xlu0 %915, %v906
    %v917 = vpop.permute.xlu0 %916
    %920 = vset.pattern.permute.xlu0 0
    %921 = vperm.xlu0 %920, %v907
    %v922 = vpop.permute.xlu0 %921
    %925 = vset.pattern.permute.xlu0 0
    %926 = vperm.xlu0 %925, %v908
    %v927 = vpop.permute.xlu0 %926
    %v929 = vadd.f32 %v897, %v912
    %v930 = vadd.f32 %v898, %v912
    %v931 = vadd.f32 %v899, %v917
    %v932 = vadd.f32 %v900, %v917
    %v933 = vadd.f32 %v901, %v922
    %v934 = vadd.f32 %v902, %v922
    %v935 = vadd.f32 %v903, %v927
    %v936 = vadd.f32 %v904, %v927
    %v937 = vand.u32 2147483647, %v929
    %vm938 = vcmp.le.f32.partialorder %v937, 0.7853982
    %vm939 = vcmp.lt.s32.totalorder %v929, 0
    %v940 = vand.u32 %v929, 2139095040
    %v941 = vshrl.u32 %v940, 23
    %v942 = vsub.s32 %v941, 127
    %v943 = vand.u32 2147483647, %v929
    %v944 = vand.u32 %v943, 8388607
    %v945 = vor.u32 %v944, 8388608
    %v946 = vsub.s32 0, %v945
    %v947 = vadd.s32 %v942, 1
    %vm948 = vcmp.gt.s32.totalorder %v947, 0
    %v949 = vsel %vm948, %v947, 0
    %v950 = vshrl.u32 %v949, 5
    %v951 = vand.u32 %v949, 31
    %v952 = vsub.s32 32, %v951
    %v953 = vshrl.u32 683565275, %v952
    %v954 = vshll.u32 683565275, %v951
    %v955 = vshrl.u32 2475754826, %v952
    %v956 = vor.u32 %v954, %v955
    %v957 = vshll.u32 2475754826, %v951
    %v958 = vshrl.u32 2131351028, %v952
    %v959 = vor.u32 %v957, %v958
    %v960 = vshll.u32 2131351028, %v951
    %v961 = vshrl.u32 2102212464, %v952
    %v962 = vor.u32 %v960, %v961
    %v963 = vshll.u32 2102212464, %v951
    %v964 = vshrl.u32 920167782, %v952
    %v965 = vor.u32 %v963, %v964
    %v966 = vshll.u32 920167782, %v951
    %v967 = vshrl.u32 1326507024, %v952
    %v968 = vor.u32 %v966, %v967
    %vm969 = vcmp.lt.s32.totalorder %v950, 1
    %vm970 = vcmp.lt.s32.totalorder %v950, 2
    %vm971 = vcmp.lt.s32.totalorder %v950, 3
    %vm972 = vcmp.lt.s32.totalorder %v950, 4
    %v973 = vsel %vm969, %v953, %v956
    %v974 = vsel %vm972, %v962, 2102212464
    %v975 = vsel %vm971, %v959, %v974
    %v976 = vsel %vm970, %v973, %v975
    %v977 = vsel %vm969, %v956, %v959
    %v978 = vsel %vm972, %v965, 920167782
    %v979 = vsel %vm971, %v962, %v978
    %v980 = vsel %vm970, %v977, %v979
    %v981 = vsel %vm969, %v959, %v962
    %v982 = vsel %vm972, %v968, 1326507024
    %v983 = vsel %vm971, %v965, %v982
    %v984 = vsel %vm970, %v981, %v983
    %v985 = vshll.u32 %v945, 8
    %v986 = vand.u32 %v985, 65535
    %v987 = vshrl.u32 %v985, 16
    %v988 = vand.u32 %v984, 65535
    %v989 = vshrl.u32 %v984, 16
    %v990 = vmul.u32 %v986, %v988
    %v991 = vmul.u32 %v986, %v989
    %v992 = vmul.u32 %v987, %v988
    %v993 = vmul.u32 %v987, %v989
    %v994 = vshll.u32 %v991, 16
    %v995 = vshrl.u32 %v991, 16
    %v996 = vshll.u32 %v992, 16
    %v997 = vshrl.u32 %v992, 16
    %vm998 = vc.u32 %v990, %v994
    %v999 = vsel %vm998, 1, 0
    %v1000 = vadd.s32 %v990, %v994
    %v1001 = vadd.s32 %v993, %v999
    %vm1002 = vc.u32 %v1000, %v996
    %v1003 = vsel %vm1002, 1, 0
    %v1004 = vadd.s32 %v1000, %v996
    %v1005 = vadd.s32 %v1001, %v1003
    %v1006 = vadd.s32 %v1005, %v995
    %v1007 = vadd.s32 %v1006, %v997
    %v1008 = vand.u32 %v985, 65535
    %v1009 = vshrl.u32 %v985, 16
    %v1010 = vand.u32 %v980, 65535
    %v1011 = vshrl.u32 %v980, 16
    %v1012 = vmul.u32 %v1008, %v1010
    %v1013 = vmul.u32 %v1008, %v1011
    %v1014 = vmul.u32 %v1009, %v1010
    %v1015 = vmul.u32 %v1009, %v1011
    %v1016 = vshll.u32 %v1013, 16
    %v1017 = vshrl.u32 %v1013, 16
    %v1018 = vshll.u32 %v1014, 16
    %v1019 = vshrl.u32 %v1014, 16
    %vm1020 = vc.u32 %v1012, %v1016
    %v1021 = vsel %vm1020, 1, 0
    %v1022 = vadd.s32 %v1012, %v1016
    %v1023 = vadd.s32 %v1015, %v1021
    %vm1024 = vc.u32 %v1022, %v1018
    %v1025 = vsel %vm1024, 1, 0
    %v1026 = vadd.s32 %v1022, %v1018
    %v1027 = vadd.s32 %v1023, %v1025
    %v1028 = vadd.s32 %v1027, %v1017
    %v1029 = vadd.s32 %v1028, %v1019
    %v1030 = vmul.u32 %v985, %v976
    %v1031 = vadd.s32 %v1007, %v1026
    %vm1032 = vc.u32 %v1007, %v1026
    %v1033 = vadd.s32 %v1029, 1
    %v1034 = vsel %vm1032, %v1033, %v1029
    %v1035 = vadd.s32 %v1030, %v1034
    %v1036 = vadd.s32 %v1035, 536870912
    %v1037 = vshrl.u32 %v1036, 30
    %v1038 = vshll.u32 %v1037, 30
    %v1039 = vsub.s32 %v1035, %v1038
    %vm1040 = vcmp.lt.s32.totalorder %v1039, 0
    %v1041 = vsub.s32 0, %v1039
    %v1042 = vsel %vm1040, %v1041, %v1039
    %v1043 = vclz %v1042
    %v1044 = vsub.s32 %v1043, 2
    %vm1045 = vcmp.gt.s32.totalorder 0, %v1044
    %v1046 = vsel %vm1045, 0, %v1044
    %v1047 = vsub.s32 32, %v1046
    %v1048 = vshll.u32 %v1039, %v1046
    %v1049 = vshrl.u32 %v1031, %v1047
    %v1050 = vor.u32 %v1048, %v1049
    %v1051 = vsub.s32 4294967266, %v1046
    %v1052 = vadd.s32 %v1051, 127
    %v1053 = vshll.u32 %v1052, 23
    %v1054 = vor.u32 4788187, %v1053
    %v1055 = vand.u32 2147483647, %v1054
    %v1057 = vcvt.s32.f32 %v1050
    %v1058 = vmul.f32 %v1057, %v1055
    %v1059 = vxor.u32 %v1058, 2147483648
    %v1060 = vsel %vm939, %v1059, %v1058
    %v1061 = vsub.s32 4, %v1037
    %v1062 = vsel %vm939, %v1061, %v1037
    %v1063 = vsel %vm938, %v929, %v1060
    %v1064 = vsel %vm938, 0, %v1062
    %v1065 = vmul.f32 %v1063, %v1063
    %v1066 = vmul.f32 %v1065, -0.001358992
    %v1067 = vadd.f32 %v1066, 0.041655596
    %v1068 = vmul.f32 %v1065, %v1067
    %v1069 = vadd.f32 %v1068, -0.4999988
    %v1070 = vmul.f32 %v1065, %v1069
    %v1071 = vadd.f32 1.0, %v1070
    %v1072 = vmul.f32 %v1063, %v1063
    %v1073 = vmul.f32 %v1072, -0.00019511016
    %v1074 = vadd.f32 %v1073, 0.008332121
    %v1075 = vmul.f32 %v1072, %v1074
    %v1076 = vadd.f32 %v1075, -0.16666654
    %v1077 = vmul.f32 %v1072, %v1076
    %v1078 = vadd.f32 %v1077, 1.0
    %v1079 = vmul.f32 %v1078, %v1063
    %vm1080 = vweird.f32 %v929
    %v1081 = vadd.s32 %v1064, 3
    %v1082 = vand.u32 %v1081, 3
    %vm1083 = vcmp.lt.s32.totalorder %v1082, 2
    %vm1084 = vcmp.eq.s32.totalorder %v1082, 0
    %v1085 = vxor.u32 %v1079, 2147483648
    %v1086 = vsel %vm1084, %v1071, %v1085
    %vm1087 = vcmp.eq.s32.totalorder %v1082, 2
    %v1088 = vxor.u32 %v1071, 2147483648
    %v1089 = vsel %vm1087, %v1088, %v1079
    %v1090 = vsel %vm1083, %v1086, %v1089
    %v1091 = vsel %vm1080, nan, %v1090
    %v1092 = vand.u32 2147483647, %v930
    %vm1093 = vcmp.le.f32.partialorder %v1092, 0.7853982
    %vm1094 = vcmp.lt.s32.totalorder %v930, 0
    %v1095 = vand.u32 %v930, 2139095040
    %v1096 = vshrl.u32 %v1095, 23
    %v1097 = vsub.s32 %v1096, 127
    %v1098 = vand.u32 2147483647, %v930
    %v1099 = vand.u32 %v1098, 8388607
    %v1100 = vor.u32 %v1099, 8388608
    %v1101 = vsub.s32 0, %v1100
    %v1102 = vadd.s32 %v1097, 1
    %vm1103 = vcmp.gt.s32.totalorder %v1102, 0
    %v1104 = vsel %vm1103, %v1102, 0
    %v1105 = vshrl.u32 %v1104, 5
    %v1106 = vand.u32 %v1104, 31
    %v1107 = vsub.s32 32, %v1106
    %v1108 = vshrl.u32 683565275, %v1107
    %v1109 = vshll.u32 683565275, %v1106
    %v1110 = vshrl.u32 2475754826, %v1107
    %v1111 = vor.u32 %v1109, %v1110
    %v1112 = vshll.u32 2475754826, %v1106
    %v1113 = vshrl.u32 2131351028, %v1107
    %v1114 = vor.u32 %v1112, %v1113
    %v1115 = vshll.u32 2131351028, %v1106
    %v1116 = vshrl.u32 2102212464, %v1107
    %v1117 = vor.u32 %v1115, %v1116
    %v1118 = vshll.u32 2102212464, %v1106
    %v1119 = vshrl.u32 920167782, %v1107
    %v1120 = vor.u32 %v1118, %v1119
    %v1121 = vshll.u32 920167782, %v1106
    %v1122 = vshrl.u32 1326507024, %v1107
    %v1123 = vor.u32 %v1121, %v1122
    %vm1124 = vcmp.lt.s32.totalorder %v1105, 1
    %vm1125 = vcmp.lt.s32.totalorder %v1105, 2
    %vm1126 = vcmp.lt.s32.totalorder %v1105, 3
    %vm1127 = vcmp.lt.s32.totalorder %v1105, 4
    %v1128 = vsel %vm1124, %v1108, %v1111
    %v1129 = vsel %vm1127, %v1117, 2102212464
    %v1130 = vsel %vm1126, %v1114, %v1129
    %v1131 = vsel %vm1125, %v1128, %v1130
    %v1132 = vsel %vm1124, %v1111, %v1114
    %v1133 = vsel %vm1127, %v1120, 920167782
    %v1134 = vsel %vm1126, %v1117, %v1133
    %v1135 = vsel %vm1125, %v1132, %v1134
    %v1136 = vsel %vm1124, %v1114, %v1117
    %v1137 = vsel %vm1127, %v1123, 1326507024
    %v1138 = vsel %vm1126, %v1120, %v1137
    %v1139 = vsel %vm1125, %v1136, %v1138
    %v1140 = vshll.u32 %v1100, 8
    %v1141 = vand.u32 %v1140, 65535
    %v1142 = vshrl.u32 %v1140, 16
    %v1143 = vand.u32 %v1139, 65535
    %v1144 = vshrl.u32 %v1139, 16
    %v1145 = vmul.u32 %v1141, %v1143
    %v1146 = vmul.u32 %v1141, %v1144
    %v1147 = vmul.u32 %v1142, %v1143
    %v1148 = vmul.u32 %v1142, %v1144
    %v1149 = vshll.u32 %v1146, 16
    %v1150 = vshrl.u32 %v1146, 16
    %v1151 = vshll.u32 %v1147, 16
    %v1152 = vshrl.u32 %v1147, 16
    %vm1153 = vc.u32 %v1145, %v1149
    %v1154 = vsel %vm1153, 1, 0
    %v1155 = vadd.s32 %v1145, %v1149
    %v1156 = vadd.s32 %v1148, %v1154
    %vm1157 = vc.u32 %v1155, %v1151
    %v1158 = vsel %vm1157, 1, 0
    %v1159 = vadd.s32 %v1155, %v1151
    %v1160 = vadd.s32 %v1156, %v1158
    %v1161 = vadd.s32 %v1160, %v1150
    %v1162 = vadd.s32 %v1161, %v1152
    %v1163 = vand.u32 %v1140, 65535
    %v1164 = vshrl.u32 %v1140, 16
    %v1165 = vand.u32 %v1135, 65535
    %v1166 = vshrl.u32 %v1135, 16
    %v1167 = vmul.u32 %v1163, %v1165
    %v1168 = vmul.u32 %v1163, %v1166
    %v1169 = vmul.u32 %v1164, %v1165
    %v1170 = vmul.u32 %v1164, %v1166
    %v1171 = vshll.u32 %v1168, 16
    %v1172 = vshrl.u32 %v1168, 16
    %v1173 = vshll.u32 %v1169, 16
    %v1174 = vshrl.u32 %v1169, 16
    %vm1175 = vc.u32 %v1167, %v1171
    %v1176 = vsel %vm1175, 1, 0
    %v1177 = vadd.s32 %v1167, %v1171
    %v1178 = vadd.s32 %v1170, %v1176
    %vm1179 = vc.u32 %v1177, %v1173
    %v1180 = vsel %vm1179, 1, 0
    %v1181 = vadd.s32 %v1177, %v1173
    %v1182 = vadd.s32 %v1178, %v1180
    %v1183 = vadd.s32 %v1182, %v1172
    %v1184 = vadd.s32 %v1183, %v1174
    %v1185 = vmul.u32 %v1140, %v1131
    %v1186 = vadd.s32 %v1162, %v1181
    %vm1187 = vc.u32 %v1162, %v1181
    %v1188 = vadd.s32 %v1184, 1
    %v1189 = vsel %vm1187, %v1188, %v1184
    %v1190 = vadd.s32 %v1185, %v1189
    %v1191 = vadd.s32 %v1190, 536870912
    %v1192 = vshrl.u32 %v1191, 30
    %v1193 = vshll.u32 %v1192, 30
    %v1194 = vsub.s32 %v1190, %v1193
    %vm1195 = vcmp.lt.s32.totalorder %v1194, 0
    %v1196 = vsub.s32 0, %v1194
    %v1197 = vsel %vm1195, %v1196, %v1194
    %v1198 = vclz %v1197
    %v1199 = vsub.s32 %v1198, 2
    %vm1200 = vcmp.gt.s32.totalorder 0, %v1199
    %v1201 = vsel %vm1200, 0, %v1199
    %v1202 = vsub.s32 32, %v1201
    %v1203 = vshll.u32 %v1194, %v1201
    %v1204 = vshrl.u32 %v1186, %v1202
    %v1205 = vor.u32 %v1203, %v1204
    %v1206 = vsub.s32 4294967266, %v1201
    %v1207 = vadd.s32 %v1206, 127
    %v1208 = vshll.u32 %v1207, 23
    %v1209 = vor.u32 4788187, %v1208
    %v1210 = vand.u32 2147483647, %v1209
    %v1212 = vcvt.s32.f32 %v1205
    %v1213 = vmul.f32 %v1212, %v1210
    %v1214 = vxor.u32 %v1213, 2147483648
    %v1215 = vsel %vm1094, %v1214, %v1213
    %v1216 = vsub.s32 4, %v1192
    %v1217 = vsel %vm1094, %v1216, %v1192
    %v1218 = vsel %vm1093, %v930, %v1215
    %v1219 = vsel %vm1093, 0, %v1217
    %v1220 = vmul.f32 %v1218, %v1218
    %v1221 = vmul.f32 %v1220, -0.001358992
    %v1222 = vadd.f32 %v1221, 0.041655596
    %v1223 = vmul.f32 %v1220, %v1222
    %v1224 = vadd.f32 %v1223, -0.4999988
    %v1225 = vmul.f32 %v1220, %v1224
    %v1226 = vadd.f32 1.0, %v1225
    %v1227 = vmul.f32 %v1218, %v1218
    %v1228 = vmul.f32 %v1227, -0.00019511016
    %v1229 = vadd.f32 %v1228, 0.008332121
    %v1230 = vmul.f32 %v1227, %v1229
    %v1231 = vadd.f32 %v1230, -0.16666654
    %v1232 = vmul.f32 %v1227, %v1231
    %v1233 = vadd.f32 %v1232, 1.0
    %v1234 = vmul.f32 %v1233, %v1218
    %vm1235 = vweird.f32 %v930
    %v1236 = vadd.s32 %v1219, 3
    %v1237 = vand.u32 %v1236, 3
    %vm1238 = vcmp.lt.s32.totalorder %v1237, 2
    %vm1239 = vcmp.eq.s32.totalorder %v1237, 0
    %v1240 = vxor.u32 %v1234, 2147483648
    %v1241 = vsel %vm1239, %v1226, %v1240
    %vm1242 = vcmp.eq.s32.totalorder %v1237, 2
    %v1243 = vxor.u32 %v1226, 2147483648
    %v1244 = vsel %vm1242, %v1243, %v1234
    %v1245 = vsel %vm1238, %v1241, %v1244
    %v1246 = vsel %vm1235, nan, %v1245
    %v1247 = vand.u32 2147483647, %v931
    %vm1248 = vcmp.le.f32.partialorder %v1247, 0.7853982
    %vm1249 = vcmp.lt.s32.totalorder %v931, 0
    %v1250 = vand.u32 %v931, 2139095040
    %v1251 = vshrl.u32 %v1250, 23
    %v1252 = vsub.s32 %v1251, 127
    %v1253 = vand.u32 2147483647, %v931
    %v1254 = vand.u32 %v1253, 8388607
    %v1255 = vor.u32 %v1254, 8388608
    %v1256 = vsub.s32 0, %v1255
    %v1257 = vadd.s32 %v1252, 1
    %vm1258 = vcmp.gt.s32.totalorder %v1257, 0
    %v1259 = vsel %vm1258, %v1257, 0
    %v1260 = vshrl.u32 %v1259, 5
    %v1261 = vand.u32 %v1259, 31
    %v1262 = vsub.s32 32, %v1261
    %v1263 = vshrl.u32 683565275, %v1262
    %v1264 = vshll.u32 683565275, %v1261
    %v1265 = vshrl.u32 2475754826, %v1262
    %v1266 = vor.u32 %v1264, %v1265
    %v1267 = vshll.u32 2475754826, %v1261
    %v1268 = vshrl.u32 2131351028, %v1262
    %v1269 = vor.u32 %v1267, %v1268
    %v1270 = vshll.u32 2131351028, %v1261
    %v1271 = vshrl.u32 2102212464, %v1262
    %v1272 = vor.u32 %v1270, %v1271
    %v1273 = vshll.u32 2102212464, %v1261
    %v1274 = vshrl.u32 920167782, %v1262
    %v1275 = vor.u32 %v1273, %v1274
    %v1276 = vshll.u32 920167782, %v1261
    %v1277 = vshrl.u32 1326507024, %v1262
    %v1278 = vor.u32 %v1276, %v1277
    %vm1279 = vcmp.lt.s32.totalorder %v1260, 1
    %vm1280 = vcmp.lt.s32.totalorder %v1260, 2
    %vm1281 = vcmp.lt.s32.totalorder %v1260, 3
    %vm1282 = vcmp.lt.s32.totalorder %v1260, 4
    %v1283 = vsel %vm1279, %v1263, %v1266
    %v1284 = vsel %vm1282, %v1272, 2102212464
    %v1285 = vsel %vm1281, %v1269, %v1284
    %v1286 = vsel %vm1280, %v1283, %v1285
    %v1287 = vsel %vm1279, %v1266, %v1269
    %v1288 = vsel %vm1282, %v1275, 920167782
    %v1289 = vsel %vm1281, %v1272, %v1288
    %v1290 = vsel %vm1280, %v1287, %v1289
    %v1291 = vsel %vm1279, %v1269, %v1272
    %v1292 = vsel %vm1282, %v1278, 1326507024
    %v1293 = vsel %vm1281, %v1275, %v1292
    %v1294 = vsel %vm1280, %v1291, %v1293
    %v1295 = vshll.u32 %v1255, 8
    %v1296 = vand.u32 %v1295, 65535
    %v1297 = vshrl.u32 %v1295, 16
    %v1298 = vand.u32 %v1294, 65535
    %v1299 = vshrl.u32 %v1294, 16
    %v1300 = vmul.u32 %v1296, %v1298
    %v1301 = vmul.u32 %v1296, %v1299
    %v1302 = vmul.u32 %v1297, %v1298
    %v1303 = vmul.u32 %v1297, %v1299
    %v1304 = vshll.u32 %v1301, 16
    %v1305 = vshrl.u32 %v1301, 16
    %v1306 = vshll.u32 %v1302, 16
    %v1307 = vshrl.u32 %v1302, 16
    %vm1308 = vc.u32 %v1300, %v1304
    %v1309 = vsel %vm1308, 1, 0
    %v1310 = vadd.s32 %v1300, %v1304
    %v1311 = vadd.s32 %v1303, %v1309
    %vm1312 = vc.u32 %v1310, %v1306
    %v1313 = vsel %vm1312, 1, 0
    %v1314 = vadd.s32 %v1310, %v1306
    %v1315 = vadd.s32 %v1311, %v1313
    %v1316 = vadd.s32 %v1315, %v1305
    %v1317 = vadd.s32 %v1316, %v1307
    %v1318 = vand.u32 %v1295, 65535
    %v1319 = vshrl.u32 %v1295, 16
    %v1320 = vand.u32 %v1290, 65535
    %v1321 = vshrl.u32 %v1290, 16
    %v1322 = vmul.u32 %v1318, %v1320
    %v1323 = vmul.u32 %v1318, %v1321
    %v1324 = vmul.u32 %v1319, %v1320
    %v1325 = vmul.u32 %v1319, %v1321
    %v1326 = vshll.u32 %v1323, 16
    %v1327 = vshrl.u32 %v1323, 16
    %v1328 = vshll.u32 %v1324, 16
    %v1329 = vshrl.u32 %v1324, 16
    %vm1330 = vc.u32 %v1322, %v1326
    %v1331 = vsel %vm1330, 1, 0
    %v1332 = vadd.s32 %v1322, %v1326
    %v1333 = vadd.s32 %v1325, %v1331
    %vm1334 = vc.u32 %v1332, %v1328
    %v1335 = vsel %vm1334, 1, 0
    %v1336 = vadd.s32 %v1332, %v1328
    %v1337 = vadd.s32 %v1333, %v1335
    %v1338 = vadd.s32 %v1337, %v1327
    %v1339 = vadd.s32 %v1338, %v1329
    %v1340 = vmul.u32 %v1295, %v1286
    %v1341 = vadd.s32 %v1317, %v1336
    %vm1342 = vc.u32 %v1317, %v1336
    %v1343 = vadd.s32 %v1339, 1
    %v1344 = vsel %vm1342, %v1343, %v1339
    %v1345 = vadd.s32 %v1340, %v1344
    %v1346 = vadd.s32 %v1345, 536870912
    %v1347 = vshrl.u32 %v1346, 30
    %v1348 = vshll.u32 %v1347, 30
    %v1349 = vsub.s32 %v1345, %v1348
    %vm1350 = vcmp.lt.s32.totalorder %v1349, 0
    %v1351 = vsub.s32 0, %v1349
    %v1352 = vsel %vm1350, %v1351, %v1349
    %v1353 = vclz %v1352
    %v1354 = vsub.s32 %v1353, 2
    %vm1355 = vcmp.gt.s32.totalorder 0, %v1354
    %v1356 = vsel %vm1355, 0, %v1354
    %v1357 = vsub.s32 32, %v1356
    %v1358 = vshll.u32 %v1349, %v1356
    %v1359 = vshrl.u32 %v1341, %v1357
    %v1360 = vor.u32 %v1358, %v1359
    %v1361 = vsub.s32 4294967266, %v1356
    %v1362 = vadd.s32 %v1361, 127
    %v1363 = vshll.u32 %v1362, 23
    %v1364 = vor.u32 4788187, %v1363
    %v1365 = vand.u32 2147483647, %v1364
    %v1367 = vcvt.s32.f32 %v1360
    %v1368 = vmul.f32 %v1367, %v1365
    %v1369 = vxor.u32 %v1368, 2147483648
    %v1370 = vsel %vm1249, %v1369, %v1368
    %v1371 = vsub.s32 4, %v1347
    %v1372 = vsel %vm1249, %v1371, %v1347
    %v1373 = vsel %vm1248, %v931, %v1370
    %v1374 = vsel %vm1248, 0, %v1372
    %v1375 = vmul.f32 %v1373, %v1373
    %v1376 = vmul.f32 %v1375, -0.001358992
    %v1377 = vadd.f32 %v1376, 0.041655596
    %v1378 = vmul.f32 %v1375, %v1377
    %v1379 = vadd.f32 %v1378, -0.4999988
    %v1380 = vmul.f32 %v1375, %v1379
    %v1381 = vadd.f32 1.0, %v1380
    %v1382 = vmul.f32 %v1373, %v1373
    %v1383 = vmul.f32 %v1382, -0.00019511016
    %v1384 = vadd.f32 %v1383, 0.008332121
    %v1385 = vmul.f32 %v1382, %v1384
    %v1386 = vadd.f32 %v1385, -0.16666654
    %v1387 = vmul.f32 %v1382, %v1386
    %v1388 = vadd.f32 %v1387, 1.0
    %v1389 = vmul.f32 %v1388, %v1373
    %vm1390 = vweird.f32 %v931
    %v1391 = vadd.s32 %v1374, 3
    %v1392 = vand.u32 %v1391, 3
    %vm1393 = vcmp.lt.s32.totalorder %v1392, 2
    %vm1394 = vcmp.eq.s32.totalorder %v1392, 0
    %v1395 = vxor.u32 %v1389, 2147483648
    %v1396 = vsel %vm1394, %v1381, %v1395
    %vm1397 = vcmp.eq.s32.totalorder %v1392, 2
    %v1398 = vxor.u32 %v1381, 2147483648
    %v1399 = vsel %vm1397, %v1398, %v1389
    %v1400 = vsel %vm1393, %v1396, %v1399
    %v1401 = vsel %vm1390, nan, %v1400
    %v1402 = vand.u32 2147483647, %v932
    %vm1403 = vcmp.le.f32.partialorder %v1402, 0.7853982
    %vm1404 = vcmp.lt.s32.totalorder %v932, 0
    %v1405 = vand.u32 %v932, 2139095040
    %v1406 = vshrl.u32 %v1405, 23
    %v1407 = vsub.s32 %v1406, 127
    %v1408 = vand.u32 2147483647, %v932
    %v1409 = vand.u32 %v1408, 8388607
    %v1410 = vor.u32 %v1409, 8388608
    %v1411 = vsub.s32 0, %v1410
    %v1412 = vadd.s32 %v1407, 1
    %vm1413 = vcmp.gt.s32.totalorder %v1412, 0
    %v1414 = vsel %vm1413, %v1412, 0
    %v1415 = vshrl.u32 %v1414, 5
    %v1416 = vand.u32 %v1414, 31
    %v1417 = vsub.s32 32, %v1416
    %v1418 = vshrl.u32 683565275, %v1417
    %v1419 = vshll.u32 683565275, %v1416
    %v1420 = vshrl.u32 2475754826, %v1417
    %v1421 = vor.u32 %v1419, %v1420
    %v1422 = vshll.u32 2475754826, %v1416
    %v1423 = vshrl.u32 2131351028, %v1417
    %v1424 = vor.u32 %v1422, %v1423
    %v1425 = vshll.u32 2131351028, %v1416
    %v1426 = vshrl.u32 2102212464, %v1417
    %v1427 = vor.u32 %v1425, %v1426
    %v1428 = vshll.u32 2102212464, %v1416
    %v1429 = vshrl.u32 920167782, %v1417
    %v1430 = vor.u32 %v1428, %v1429
    %v1431 = vshll.u32 920167782, %v1416
    %v1432 = vshrl.u32 1326507024, %v1417
    %v1433 = vor.u32 %v1431, %v1432
    %vm1434 = vcmp.lt.s32.totalorder %v1415, 1
    %vm1435 = vcmp.lt.s32.totalorder %v1415, 2
    %vm1436 = vcmp.lt.s32.totalorder %v1415, 3
    %vm1437 = vcmp.lt.s32.totalorder %v1415, 4
    %v1438 = vsel %vm1434, %v1418, %v1421
    %v1439 = vsel %vm1437, %v1427, 2102212464
    %v1440 = vsel %vm1436, %v1424, %v1439
    %v1441 = vsel %vm1435, %v1438, %v1440
    %v1442 = vsel %vm1434, %v1421, %v1424
    %v1443 = vsel %vm1437, %v1430, 920167782
    %v1444 = vsel %vm1436, %v1427, %v1443
    %v1445 = vsel %vm1435, %v1442, %v1444
    %v1446 = vsel %vm1434, %v1424, %v1427
    %v1447 = vsel %vm1437, %v1433, 1326507024
    %v1448 = vsel %vm1436, %v1430, %v1447
    %v1449 = vsel %vm1435, %v1446, %v1448
    %v1450 = vshll.u32 %v1410, 8
    %v1451 = vand.u32 %v1450, 65535
    %v1452 = vshrl.u32 %v1450, 16
    %v1453 = vand.u32 %v1449, 65535
    %v1454 = vshrl.u32 %v1449, 16
    %v1455 = vmul.u32 %v1451, %v1453
    %v1456 = vmul.u32 %v1451, %v1454
    %v1457 = vmul.u32 %v1452, %v1453
    %v1458 = vmul.u32 %v1452, %v1454
    %v1459 = vshll.u32 %v1456, 16
    %v1460 = vshrl.u32 %v1456, 16
    %v1461 = vshll.u32 %v1457, 16
    %v1462 = vshrl.u32 %v1457, 16
    %vm1463 = vc.u32 %v1455, %v1459
    %v1464 = vsel %vm1463, 1, 0
    %v1465 = vadd.s32 %v1455, %v1459
    %v1466 = vadd.s32 %v1458, %v1464
    %vm1467 = vc.u32 %v1465, %v1461
    %v1468 = vsel %vm1467, 1, 0
    %v1469 = vadd.s32 %v1465, %v1461
    %v1470 = vadd.s32 %v1466, %v1468
    %v1471 = vadd.s32 %v1470, %v1460
    %v1472 = vadd.s32 %v1471, %v1462
    %v1473 = vand.u32 %v1450, 65535
    %v1474 = vshrl.u32 %v1450, 16
    %v1475 = vand.u32 %v1445, 65535
    %v1476 = vshrl.u32 %v1445, 16
    %v1477 = vmul.u32 %v1473, %v1475
    %v1478 = vmul.u32 %v1473, %v1476
    %v1479 = vmul.u32 %v1474, %v1475
    %v1480 = vmul.u32 %v1474, %v1476
    %v1481 = vshll.u32 %v1478, 16
    %v1482 = vshrl.u32 %v1478, 16
    %v1483 = vshll.u32 %v1479, 16
    %v1484 = vshrl.u32 %v1479, 16
    %vm1485 = vc.u32 %v1477, %v1481
    %v1486 = vsel %vm1485, 1, 0
    %v1487 = vadd.s32 %v1477, %v1481
    %v1488 = vadd.s32 %v1480, %v1486
    %vm1489 = vc.u32 %v1487, %v1483
    %v1490 = vsel %vm1489, 1, 0
    %v1491 = vadd.s32 %v1487, %v1483
    %v1492 = vadd.s32 %v1488, %v1490
    %v1493 = vadd.s32 %v1492, %v1482
    %v1494 = vadd.s32 %v1493, %v1484
    %v1495 = vmul.u32 %v1450, %v1441
    %v1496 = vadd.s32 %v1472, %v1491
    %vm1497 = vc.u32 %v1472, %v1491
    %v1498 = vadd.s32 %v1494, 1
    %v1499 = vsel %vm1497, %v1498, %v1494
    %v1500 = vadd.s32 %v1495, %v1499
    %v1501 = vadd.s32 %v1500, 536870912
    %v1502 = vshrl.u32 %v1501, 30
    %v1503 = vshll.u32 %v1502, 30
    %v1504 = vsub.s32 %v1500, %v1503
    %vm1505 = vcmp.lt.s32.totalorder %v1504, 0
    %v1506 = vsub.s32 0, %v1504
    %v1507 = vsel %vm1505, %v1506, %v1504
    %v1508 = vclz %v1507
    %v1509 = vsub.s32 %v1508, 2
    %vm1510 = vcmp.gt.s32.totalorder 0, %v1509
    %v1511 = vsel %vm1510, 0, %v1509
    %v1512 = vsub.s32 32, %v1511
    %v1513 = vshll.u32 %v1504, %v1511
    %v1514 = vshrl.u32 %v1496, %v1512
    %v1515 = vor.u32 %v1513, %v1514
    %v1516 = vsub.s32 4294967266, %v1511
    %v1517 = vadd.s32 %v1516, 127
    %v1518 = vshll.u32 %v1517, 23
    %v1519 = vor.u32 4788187, %v1518
    %v1520 = vand.u32 2147483647, %v1519
    %v1522 = vcvt.s32.f32 %v1515
    %v1523 = vmul.f32 %v1522, %v1520
    %v1524 = vxor.u32 %v1523, 2147483648
    %v1525 = vsel %vm1404, %v1524, %v1523
    %v1526 = vsub.s32 4, %v1502
    %v1527 = vsel %vm1404, %v1526, %v1502
    %v1528 = vsel %vm1403, %v932, %v1525
    %v1529 = vsel %vm1403, 0, %v1527
    %v1530 = vmul.f32 %v1528, %v1528
    %v1531 = vmul.f32 %v1530, -0.001358992
    %v1532 = vadd.f32 %v1531, 0.041655596
    %v1533 = vmul.f32 %v1530, %v1532
    %v1534 = vadd.f32 %v1533, -0.4999988
    %v1535 = vmul.f32 %v1530, %v1534
    %v1536 = vadd.f32 1.0, %v1535
    %v1537 = vmul.f32 %v1528, %v1528
    %v1538 = vmul.f32 %v1537, -0.00019511016
    %v1539 = vadd.f32 %v1538, 0.008332121
    %v1540 = vmul.f32 %v1537, %v1539
    %v1541 = vadd.f32 %v1540, -0.16666654
    %v1542 = vmul.f32 %v1537, %v1541
    %v1543 = vadd.f32 %v1542, 1.0
    %v1544 = vmul.f32 %v1543, %v1528
    %vm1545 = vweird.f32 %v932
    %v1546 = vadd.s32 %v1529, 3
    %v1547 = vand.u32 %v1546, 3
    %vm1548 = vcmp.lt.s32.totalorder %v1547, 2
    %vm1549 = vcmp.eq.s32.totalorder %v1547, 0
    %v1550 = vxor.u32 %v1544, 2147483648
    %v1551 = vsel %vm1549, %v1536, %v1550
    %vm1552 = vcmp.eq.s32.totalorder %v1547, 2
    %v1553 = vxor.u32 %v1536, 2147483648
    %v1554 = vsel %vm1552, %v1553, %v1544
    %v1555 = vsel %vm1548, %v1551, %v1554
    %v1556 = vsel %vm1545, nan, %v1555
    %v1557 = vand.u32 2147483647, %v933
    %vm1558 = vcmp.le.f32.partialorder %v1557, 0.7853982
    %vm1559 = vcmp.lt.s32.totalorder %v933, 0
    %v1560 = vand.u32 %v933, 2139095040
    %v1561 = vshrl.u32 %v1560, 23
    %v1562 = vsub.s32 %v1561, 127
    %v1563 = vand.u32 2147483647, %v933
    %v1564 = vand.u32 %v1563, 8388607
    %v1565 = vor.u32 %v1564, 8388608
    %v1566 = vsub.s32 0, %v1565
    %v1567 = vadd.s32 %v1562, 1
    %vm1568 = vcmp.gt.s32.totalorder %v1567, 0
    %v1569 = vsel %vm1568, %v1567, 0
    %v1570 = vshrl.u32 %v1569, 5
    %v1571 = vand.u32 %v1569, 31
    %v1572 = vsub.s32 32, %v1571
    %v1573 = vshrl.u32 683565275, %v1572
    %v1574 = vshll.u32 683565275, %v1571
    %v1575 = vshrl.u32 2475754826, %v1572
    %v1576 = vor.u32 %v1574, %v1575
    %v1577 = vshll.u32 2475754826, %v1571
    %v1578 = vshrl.u32 2131351028, %v1572
    %v1579 = vor.u32 %v1577, %v1578
    %v1580 = vshll.u32 2131351028, %v1571
    %v1581 = vshrl.u32 2102212464, %v1572
    %v1582 = vor.u32 %v1580, %v1581
    %v1583 = vshll.u32 2102212464, %v1571
    %v1584 = vshrl.u32 920167782, %v1572
    %v1585 = vor.u32 %v1583, %v1584
    %v1586 = vshll.u32 920167782, %v1571
    %v1587 = vshrl.u32 1326507024, %v1572
    %v1588 = vor.u32 %v1586, %v1587
    %vm1589 = vcmp.lt.s32.totalorder %v1570, 1
    %vm1590 = vcmp.lt.s32.totalorder %v1570, 2
    %vm1591 = vcmp.lt.s32.totalorder %v1570, 3
    %vm1592 = vcmp.lt.s32.totalorder %v1570, 4
    %v1593 = vsel %vm1589, %v1573, %v1576
    %v1594 = vsel %vm1592, %v1582, 2102212464
    %v1595 = vsel %vm1591, %v1579, %v1594
    %v1596 = vsel %vm1590, %v1593, %v1595
    %v1597 = vsel %vm1589, %v1576, %v1579
    %v1598 = vsel %vm1592, %v1585, 920167782
    %v1599 = vsel %vm1591, %v1582, %v1598
    %v1600 = vsel %vm1590, %v1597, %v1599
    %v1601 = vsel %vm1589, %v1579, %v1582
    %v1602 = vsel %vm1592, %v1588, 1326507024
    %v1603 = vsel %vm1591, %v1585, %v1602
    %v1604 = vsel %vm1590, %v1601, %v1603
    %v1605 = vshll.u32 %v1565, 8
    %v1606 = vand.u32 %v1605, 65535
    %v1607 = vshrl.u32 %v1605, 16
    %v1608 = vand.u32 %v1604, 65535
    %v1609 = vshrl.u32 %v1604, 16
    %v1610 = vmul.u32 %v1606, %v1608
    %v1611 = vmul.u32 %v1606, %v1609
    %v1612 = vmul.u32 %v1607, %v1608
    %v1613 = vmul.u32 %v1607, %v1609
    %v1614 = vshll.u32 %v1611, 16
    %v1615 = vshrl.u32 %v1611, 16
    %v1616 = vshll.u32 %v1612, 16
    %v1617 = vshrl.u32 %v1612, 16
    %vm1618 = vc.u32 %v1610, %v1614
    %v1619 = vsel %vm1618, 1, 0
    %v1620 = vadd.s32 %v1610, %v1614
    %v1621 = vadd.s32 %v1613, %v1619
    %vm1622 = vc.u32 %v1620, %v1616
    %v1623 = vsel %vm1622, 1, 0
    %v1624 = vadd.s32 %v1620, %v1616
    %v1625 = vadd.s32 %v1621, %v1623
    %v1626 = vadd.s32 %v1625, %v1615
    %v1627 = vadd.s32 %v1626, %v1617
    %v1628 = vand.u32 %v1605, 65535
    %v1629 = vshrl.u32 %v1605, 16
    %v1630 = vand.u32 %v1600, 65535
    %v1631 = vshrl.u32 %v1600, 16
    %v1632 = vmul.u32 %v1628, %v1630
    %v1633 = vmul.u32 %v1628, %v1631
    %v1634 = vmul.u32 %v1629, %v1630
    %v1635 = vmul.u32 %v1629, %v1631
    %v1636 = vshll.u32 %v1633, 16
    %v1637 = vshrl.u32 %v1633, 16
    %v1638 = vshll.u32 %v1634, 16
    %v1639 = vshrl.u32 %v1634, 16
    %vm1640 = vc.u32 %v1632, %v1636
    %v1641 = vsel %vm1640, 1, 0
    %v1642 = vadd.s32 %v1632, %v1636
    %v1643 = vadd.s32 %v1635, %v1641
    %vm1644 = vc.u32 %v1642, %v1638
    %v1645 = vsel %vm1644, 1, 0
    %v1646 = vadd.s32 %v1642, %v1638
    %v1647 = vadd.s32 %v1643, %v1645
    %v1648 = vadd.s32 %v1647, %v1637
    %v1649 = vadd.s32 %v1648, %v1639
    %v1650 = vmul.u32 %v1605, %v1596
    %v1651 = vadd.s32 %v1627, %v1646
    %vm1652 = vc.u32 %v1627, %v1646
    %v1653 = vadd.s32 %v1649, 1
    %v1654 = vsel %vm1652, %v1653, %v1649
    %v1655 = vadd.s32 %v1650, %v1654
    %v1656 = vadd.s32 %v1655, 536870912
    %v1657 = vshrl.u32 %v1656, 30
    %v1658 = vshll.u32 %v1657, 30
    %v1659 = vsub.s32 %v1655, %v1658
    %vm1660 = vcmp.lt.s32.totalorder %v1659, 0
    %v1661 = vsub.s32 0, %v1659
    %v1662 = vsel %vm1660, %v1661, %v1659
    %v1663 = vclz %v1662
    %v1664 = vsub.s32 %v1663, 2
    %vm1665 = vcmp.gt.s32.totalorder 0, %v1664
    %v1666 = vsel %vm1665, 0, %v1664
    %v1667 = vsub.s32 32, %v1666
    %v1668 = vshll.u32 %v1659, %v1666
    %v1669 = vshrl.u32 %v1651, %v1667
    %v1670 = vor.u32 %v1668, %v1669
    %v1671 = vsub.s32 4294967266, %v1666
    %v1672 = vadd.s32 %v1671, 127
    %v1673 = vshll.u32 %v1672, 23
    %v1674 = vor.u32 4788187, %v1673
    %v1675 = vand.u32 2147483647, %v1674
    %v1677 = vcvt.s32.f32 %v1670
    %v1678 = vmul.f32 %v1677, %v1675
    %v1679 = vxor.u32 %v1678, 2147483648
    %v1680 = vsel %vm1559, %v1679, %v1678
    %v1681 = vsub.s32 4, %v1657
    %v1682 = vsel %vm1559, %v1681, %v1657
    %v1683 = vsel %vm1558, %v933, %v1680
    %v1684 = vsel %vm1558, 0, %v1682
    %v1685 = vmul.f32 %v1683, %v1683
    %v1686 = vmul.f32 %v1685, -0.001358992
    %v1687 = vadd.f32 %v1686, 0.041655596
    %v1688 = vmul.f32 %v1685, %v1687
    %v1689 = vadd.f32 %v1688, -0.4999988
    %v1690 = vmul.f32 %v1685, %v1689
    %v1691 = vadd.f32 1.0, %v1690
    %v1692 = vmul.f32 %v1683, %v1683
    %v1693 = vmul.f32 %v1692, -0.00019511016
    %v1694 = vadd.f32 %v1693, 0.008332121
    %v1695 = vmul.f32 %v1692, %v1694
    %v1696 = vadd.f32 %v1695, -0.16666654
    %v1697 = vmul.f32 %v1692, %v1696
    %v1698 = vadd.f32 %v1697, 1.0
    %v1699 = vmul.f32 %v1698, %v1683
    %vm1700 = vweird.f32 %v933
    %v1701 = vadd.s32 %v1684, 3
    %v1702 = vand.u32 %v1701, 3
    %vm1703 = vcmp.lt.s32.totalorder %v1702, 2
    %vm1704 = vcmp.eq.s32.totalorder %v1702, 0
    %v1705 = vxor.u32 %v1699, 2147483648
    %v1706 = vsel %vm1704, %v1691, %v1705
    %vm1707 = vcmp.eq.s32.totalorder %v1702, 2
    %v1708 = vxor.u32 %v1691, 2147483648
    %v1709 = vsel %vm1707, %v1708, %v1699
    %v1710 = vsel %vm1703, %v1706, %v1709
    %v1711 = vsel %vm1700, nan, %v1710
    %v1712 = vand.u32 2147483647, %v934
    %vm1713 = vcmp.le.f32.partialorder %v1712, 0.7853982
    %vm1714 = vcmp.lt.s32.totalorder %v934, 0
    %v1715 = vand.u32 %v934, 2139095040
    %v1716 = vshrl.u32 %v1715, 23
    %v1717 = vsub.s32 %v1716, 127
    %v1718 = vand.u32 2147483647, %v934
    %v1719 = vand.u32 %v1718, 8388607
    %v1720 = vor.u32 %v1719, 8388608
    %v1721 = vsub.s32 0, %v1720
    %v1722 = vadd.s32 %v1717, 1
    %vm1723 = vcmp.gt.s32.totalorder %v1722, 0
    %v1724 = vsel %vm1723, %v1722, 0
    %v1725 = vshrl.u32 %v1724, 5
    %v1726 = vand.u32 %v1724, 31
    %v1727 = vsub.s32 32, %v1726
    %v1728 = vshrl.u32 683565275, %v1727
    %v1729 = vshll.u32 683565275, %v1726
    %v1730 = vshrl.u32 2475754826, %v1727
    %v1731 = vor.u32 %v1729, %v1730
    %v1732 = vshll.u32 2475754826, %v1726
    %v1733 = vshrl.u32 2131351028, %v1727
    %v1734 = vor.u32 %v1732, %v1733
    %v1735 = vshll.u32 2131351028, %v1726
    %v1736 = vshrl.u32 2102212464, %v1727
    %v1737 = vor.u32 %v1735, %v1736
    %v1738 = vshll.u32 2102212464, %v1726
    %v1739 = vshrl.u32 920167782, %v1727
    %v1740 = vor.u32 %v1738, %v1739
    %v1741 = vshll.u32 920167782, %v1726
    %v1742 = vshrl.u32 1326507024, %v1727
    %v1743 = vor.u32 %v1741, %v1742
    %vm1744 = vcmp.lt.s32.totalorder %v1725, 1
    %vm1745 = vcmp.lt.s32.totalorder %v1725, 2
    %vm1746 = vcmp.lt.s32.totalorder %v1725, 3
    %vm1747 = vcmp.lt.s32.totalorder %v1725, 4
    %v1748 = vsel %vm1744, %v1728, %v1731
    %v1749 = vsel %vm1747, %v1737, 2102212464
    %v1750 = vsel %vm1746, %v1734, %v1749
    %v1751 = vsel %vm1745, %v1748, %v1750
    %v1752 = vsel %vm1744, %v1731, %v1734
    %v1753 = vsel %vm1747, %v1740, 920167782
    %v1754 = vsel %vm1746, %v1737, %v1753
    %v1755 = vsel %vm1745, %v1752, %v1754
    %v1756 = vsel %vm1744, %v1734, %v1737
    %v1757 = vsel %vm1747, %v1743, 1326507024
    %v1758 = vsel %vm1746, %v1740, %v1757
    %v1759 = vsel %vm1745, %v1756, %v1758
    %v1760 = vshll.u32 %v1720, 8
    %v1761 = vand.u32 %v1760, 65535
    %v1762 = vshrl.u32 %v1760, 16
    %v1763 = vand.u32 %v1759, 65535
    %v1764 = vshrl.u32 %v1759, 16
    %v1765 = vmul.u32 %v1761, %v1763
    %v1766 = vmul.u32 %v1761, %v1764
    %v1767 = vmul.u32 %v1762, %v1763
    %v1768 = vmul.u32 %v1762, %v1764
    %v1769 = vshll.u32 %v1766, 16
    %v1770 = vshrl.u32 %v1766, 16
    %v1771 = vshll.u32 %v1767, 16
    %v1772 = vshrl.u32 %v1767, 16
    %vm1773 = vc.u32 %v1765, %v1769
    %v1774 = vsel %vm1773, 1, 0
    %v1775 = vadd.s32 %v1765, %v1769
    %v1776 = vadd.s32 %v1768, %v1774
    %vm1777 = vc.u32 %v1775, %v1771
    %v1778 = vsel %vm1777, 1, 0
    %v1779 = vadd.s32 %v1775, %v1771
    %v1780 = vadd.s32 %v1776, %v1778
    %v1781 = vadd.s32 %v1780, %v1770
    %v1782 = vadd.s32 %v1781, %v1772
    %v1783 = vand.u32 %v1760, 65535
    %v1784 = vshrl.u32 %v1760, 16
    %v1785 = vand.u32 %v1755, 65535
    %v1786 = vshrl.u32 %v1755, 16
    %v1787 = vmul.u32 %v1783, %v1785
    %v1788 = vmul.u32 %v1783, %v1786
    %v1789 = vmul.u32 %v1784, %v1785
    %v1790 = vmul.u32 %v1784, %v1786
    %v1791 = vshll.u32 %v1788, 16
    %v1792 = vshrl.u32 %v1788, 16
    %v1793 = vshll.u32 %v1789, 16
    %v1794 = vshrl.u32 %v1789, 16
    %vm1795 = vc.u32 %v1787, %v1791
    %v1796 = vsel %vm1795, 1, 0
    %v1797 = vadd.s32 %v1787, %v1791
    %v1798 = vadd.s32 %v1790, %v1796
    %vm1799 = vc.u32 %v1797, %v1793
    %v1800 = vsel %vm1799, 1, 0
    %v1801 = vadd.s32 %v1797, %v1793
    %v1802 = vadd.s32 %v1798, %v1800
    %v1803 = vadd.s32 %v1802, %v1792
    %v1804 = vadd.s32 %v1803, %v1794
    %v1805 = vmul.u32 %v1760, %v1751
    %v1806 = vadd.s32 %v1782, %v1801
    %vm1807 = vc.u32 %v1782, %v1801
    %v1808 = vadd.s32 %v1804, 1
    %v1809 = vsel %vm1807, %v1808, %v1804
    %v1810 = vadd.s32 %v1805, %v1809
    %v1811 = vadd.s32 %v1810, 536870912
    %v1812 = vshrl.u32 %v1811, 30
    %v1813 = vshll.u32 %v1812, 30
    %v1814 = vsub.s32 %v1810, %v1813
    %vm1815 = vcmp.lt.s32.totalorder %v1814, 0
    %v1816 = vsub.s32 0, %v1814
    %v1817 = vsel %vm1815, %v1816, %v1814
    %v1818 = vclz %v1817
    %v1819 = vsub.s32 %v1818, 2
    %vm1820 = vcmp.gt.s32.totalorder 0, %v1819
    %v1821 = vsel %vm1820, 0, %v1819
    %v1822 = vsub.s32 32, %v1821
    %v1823 = vshll.u32 %v1814, %v1821
    %v1824 = vshrl.u32 %v1806, %v1822
    %v1825 = vor.u32 %v1823, %v1824
    %v1826 = vsub.s32 4294967266, %v1821
    %v1827 = vadd.s32 %v1826, 127
    %v1828 = vshll.u32 %v1827, 23
    %v1829 = vor.u32 4788187, %v1828
    %v1830 = vand.u32 2147483647, %v1829
    %v1832 = vcvt.s32.f32 %v1825
    %v1833 = vmul.f32 %v1832, %v1830
    %v1834 = vxor.u32 %v1833, 2147483648
    %v1835 = vsel %vm1714, %v1834, %v1833
    %v1836 = vsub.s32 4, %v1812
    %v1837 = vsel %vm1714, %v1836, %v1812
    %v1838 = vsel %vm1713, %v934, %v1835
    %v1839 = vsel %vm1713, 0, %v1837
    %v1840 = vmul.f32 %v1838, %v1838
    %v1841 = vmul.f32 %v1840, -0.001358992
    %v1842 = vadd.f32 %v1841, 0.041655596
    %v1843 = vmul.f32 %v1840, %v1842
    %v1844 = vadd.f32 %v1843, -0.4999988
    %v1845 = vmul.f32 %v1840, %v1844
    %v1846 = vadd.f32 1.0, %v1845
    %v1847 = vmul.f32 %v1838, %v1838
    %v1848 = vmul.f32 %v1847, -0.00019511016
    %v1849 = vadd.f32 %v1848, 0.008332121
    %v1850 = vmul.f32 %v1847, %v1849
    %v1851 = vadd.f32 %v1850, -0.16666654
    %v1852 = vmul.f32 %v1847, %v1851
    %v1853 = vadd.f32 %v1852, 1.0
    %v1854 = vmul.f32 %v1853, %v1838
    %vm1855 = vweird.f32 %v934
    %v1856 = vadd.s32 %v1839, 3
    %v1857 = vand.u32 %v1856, 3
    %vm1858 = vcmp.lt.s32.totalorder %v1857, 2
    %vm1859 = vcmp.eq.s32.totalorder %v1857, 0
    %v1860 = vxor.u32 %v1854, 2147483648
    %v1861 = vsel %vm1859, %v1846, %v1860
    %vm1862 = vcmp.eq.s32.totalorder %v1857, 2
    %v1863 = vxor.u32 %v1846, 2147483648
    %v1864 = vsel %vm1862, %v1863, %v1854
    %v1865 = vsel %vm1858, %v1861, %v1864
    %v1866 = vsel %vm1855, nan, %v1865
    %v1867 = vand.u32 2147483647, %v935
    %vm1868 = vcmp.le.f32.partialorder %v1867, 0.7853982
    %vm1869 = vcmp.lt.s32.totalorder %v935, 0
    %v1870 = vand.u32 %v935, 2139095040
    %v1871 = vshrl.u32 %v1870, 23
    %v1872 = vsub.s32 %v1871, 127
    %v1873 = vand.u32 2147483647, %v935
    %v1874 = vand.u32 %v1873, 8388607
    %v1875 = vor.u32 %v1874, 8388608
    %v1876 = vsub.s32 0, %v1875
    %v1877 = vadd.s32 %v1872, 1
    %vm1878 = vcmp.gt.s32.totalorder %v1877, 0
    %v1879 = vsel %vm1878, %v1877, 0
    %v1880 = vshrl.u32 %v1879, 5
    %v1881 = vand.u32 %v1879, 31
    %v1882 = vsub.s32 32, %v1881
    %v1883 = vshrl.u32 683565275, %v1882
    %v1884 = vshll.u32 683565275, %v1881
    %v1885 = vshrl.u32 2475754826, %v1882
    %v1886 = vor.u32 %v1884, %v1885
    %v1887 = vshll.u32 2475754826, %v1881
    %v1888 = vshrl.u32 2131351028, %v1882
    %v1889 = vor.u32 %v1887, %v1888
    %v1890 = vshll.u32 2131351028, %v1881
    %v1891 = vshrl.u32 2102212464, %v1882
    %v1892 = vor.u32 %v1890, %v1891
    %v1893 = vshll.u32 2102212464, %v1881
    %v1894 = vshrl.u32 920167782, %v1882
    %v1895 = vor.u32 %v1893, %v1894
    %v1896 = vshll.u32 920167782, %v1881
    %v1897 = vshrl.u32 1326507024, %v1882
    %v1898 = vor.u32 %v1896, %v1897
    %vm1899 = vcmp.lt.s32.totalorder %v1880, 1
    %vm1900 = vcmp.lt.s32.totalorder %v1880, 2
    %vm1901 = vcmp.lt.s32.totalorder %v1880, 3
    %vm1902 = vcmp.lt.s32.totalorder %v1880, 4
    %v1903 = vsel %vm1899, %v1883, %v1886
    %v1904 = vsel %vm1902, %v1892, 2102212464
    %v1905 = vsel %vm1901, %v1889, %v1904
    %v1906 = vsel %vm1900, %v1903, %v1905
    %v1907 = vsel %vm1899, %v1886, %v1889
    %v1908 = vsel %vm1902, %v1895, 920167782
    %v1909 = vsel %vm1901, %v1892, %v1908
    %v1910 = vsel %vm1900, %v1907, %v1909
    %v1911 = vsel %vm1899, %v1889, %v1892
    %v1912 = vsel %vm1902, %v1898, 1326507024
    %v1913 = vsel %vm1901, %v1895, %v1912
    %v1914 = vsel %vm1900, %v1911, %v1913
    %v1915 = vshll.u32 %v1875, 8
    %v1916 = vand.u32 %v1915, 65535
    %v1917 = vshrl.u32 %v1915, 16
    %v1918 = vand.u32 %v1914, 65535
    %v1919 = vshrl.u32 %v1914, 16
    %v1920 = vmul.u32 %v1916, %v1918
    %v1921 = vmul.u32 %v1916, %v1919
    %v1922 = vmul.u32 %v1917, %v1918
    %v1923 = vmul.u32 %v1917, %v1919
    %v1924 = vshll.u32 %v1921, 16
    %v1925 = vshrl.u32 %v1921, 16
    %v1926 = vshll.u32 %v1922, 16
    %v1927 = vshrl.u32 %v1922, 16
    %vm1928 = vc.u32 %v1920, %v1924
    %v1929 = vsel %vm1928, 1, 0
    %v1930 = vadd.s32 %v1920, %v1924
    %v1931 = vadd.s32 %v1923, %v1929
    %vm1932 = vc.u32 %v1930, %v1926
    %v1933 = vsel %vm1932, 1, 0
    %v1934 = vadd.s32 %v1930, %v1926
    %v1935 = vadd.s32 %v1931, %v1933
    %v1936 = vadd.s32 %v1935, %v1925
    %v1937 = vadd.s32 %v1936, %v1927
    %v1938 = vand.u32 %v1915, 65535
    %v1939 = vshrl.u32 %v1915, 16
    %v1940 = vand.u32 %v1910, 65535
    %v1941 = vshrl.u32 %v1910, 16
    %v1942 = vmul.u32 %v1938, %v1940
    %v1943 = vmul.u32 %v1938, %v1941
    %v1944 = vmul.u32 %v1939, %v1940
    %v1945 = vmul.u32 %v1939, %v1941
    %v1946 = vshll.u32 %v1943, 16
    %v1947 = vshrl.u32 %v1943, 16
    %v1948 = vshll.u32 %v1944, 16
    %v1949 = vshrl.u32 %v1944, 16
    %vm1950 = vc.u32 %v1942, %v1946
    %v1951 = vsel %vm1950, 1, 0
    %v1952 = vadd.s32 %v1942, %v1946
    %v1953 = vadd.s32 %v1945, %v1951
    %vm1954 = vc.u32 %v1952, %v1948
    %v1955 = vsel %vm1954, 1, 0
    %v1956 = vadd.s32 %v1952, %v1948
    %v1957 = vadd.s32 %v1953, %v1955
    %v1958 = vadd.s32 %v1957, %v1947
    %v1959 = vadd.s32 %v1958, %v1949
    %v1960 = vmul.u32 %v1915, %v1906
    %v1961 = vadd.s32 %v1937, %v1956
    %vm1962 = vc.u32 %v1937, %v1956
    %v1963 = vadd.s32 %v1959, 1
    %v1964 = vsel %vm1962, %v1963, %v1959
    %v1965 = vadd.s32 %v1960, %v1964
    %v1966 = vadd.s32 %v1965, 536870912
    %v1967 = vshrl.u32 %v1966, 30
    %v1968 = vshll.u32 %v1967, 30
    %v1969 = vsub.s32 %v1965, %v1968
    %vm1970 = vcmp.lt.s32.totalorder %v1969, 0
    %v1971 = vsub.s32 0, %v1969
    %v1972 = vsel %vm1970, %v1971, %v1969
    %v1973 = vclz %v1972
    %v1974 = vsub.s32 %v1973, 2
    %vm1975 = vcmp.gt.s32.totalorder 0, %v1974
    %v1976 = vsel %vm1975, 0, %v1974
    %v1977 = vsub.s32 32, %v1976
    %v1978 = vshll.u32 %v1969, %v1976
    %v1979 = vshrl.u32 %v1961, %v1977
    %v1980 = vor.u32 %v1978, %v1979
    %v1981 = vsub.s32 4294967266, %v1976
    %v1982 = vadd.s32 %v1981, 127
    %v1983 = vshll.u32 %v1982, 23
    %v1984 = vor.u32 4788187, %v1983
    %v1985 = vand.u32 2147483647, %v1984
    %v1987 = vcvt.s32.f32 %v1980
    %v1988 = vmul.f32 %v1987, %v1985
    %v1989 = vxor.u32 %v1988, 2147483648
    %v1990 = vsel %vm1869, %v1989, %v1988
    %v1991 = vsub.s32 4, %v1967
    %v1992 = vsel %vm1869, %v1991, %v1967
    %v1993 = vsel %vm1868, %v935, %v1990
    %v1994 = vsel %vm1868, 0, %v1992
    %v1995 = vmul.f32 %v1993, %v1993
    %v1996 = vmul.f32 %v1995, -0.001358992
    %v1997 = vadd.f32 %v1996, 0.041655596
    %v1998 = vmul.f32 %v1995, %v1997
    %v1999 = vadd.f32 %v1998, -0.4999988
    %v2000 = vmul.f32 %v1995, %v1999
    %v2001 = vadd.f32 1.0, %v2000
    %v2002 = vmul.f32 %v1993, %v1993
    %v2003 = vmul.f32 %v2002, -0.00019511016
    %v2004 = vadd.f32 %v2003, 0.008332121
    %v2005 = vmul.f32 %v2002, %v2004
    %v2006 = vadd.f32 %v2005, -0.16666654
    %v2007 = vmul.f32 %v2002, %v2006
    %v2008 = vadd.f32 %v2007, 1.0
    %v2009 = vmul.f32 %v2008, %v1993
    %vm2010 = vweird.f32 %v935
    %v2011 = vadd.s32 %v1994, 3
    %v2012 = vand.u32 %v2011, 3
    %vm2013 = vcmp.lt.s32.totalorder %v2012, 2
    %vm2014 = vcmp.eq.s32.totalorder %v2012, 0
    %v2015 = vxor.u32 %v2009, 2147483648
    %v2016 = vsel %vm2014, %v2001, %v2015
    %vm2017 = vcmp.eq.s32.totalorder %v2012, 2
    %v2018 = vxor.u32 %v2001, 2147483648
    %v2019 = vsel %vm2017, %v2018, %v2009
    %v2020 = vsel %vm2013, %v2016, %v2019
    %v2021 = vsel %vm2010, nan, %v2020
    %v2022 = vand.u32 2147483647, %v936
    %vm2023 = vcmp.le.f32.partialorder %v2022, 0.7853982
    %vm2024 = vcmp.lt.s32.totalorder %v936, 0
    %v2025 = vand.u32 %v936, 2139095040
    %v2026 = vshrl.u32 %v2025, 23
    %v2027 = vsub.s32 %v2026, 127
    %v2028 = vand.u32 2147483647, %v936
    %v2029 = vand.u32 %v2028, 8388607
    %v2030 = vor.u32 %v2029, 8388608
    %v2031 = vsub.s32 0, %v2030
    %v2032 = vadd.s32 %v2027, 1
    %vm2033 = vcmp.gt.s32.totalorder %v2032, 0
    %v2034 = vsel %vm2033, %v2032, 0
    %v2035 = vshrl.u32 %v2034, 5
    %v2036 = vand.u32 %v2034, 31
    %v2037 = vsub.s32 32, %v2036
    %v2038 = vshrl.u32 683565275, %v2037
    %v2039 = vshll.u32 683565275, %v2036
    %v2040 = vshrl.u32 2475754826, %v2037
    %v2041 = vor.u32 %v2039, %v2040
    %v2042 = vshll.u32 2475754826, %v2036
    %v2043 = vshrl.u32 2131351028, %v2037
    %v2044 = vor.u32 %v2042, %v2043
    %v2045 = vshll.u32 2131351028, %v2036
    %v2046 = vshrl.u32 2102212464, %v2037
    %v2047 = vor.u32 %v2045, %v2046
    %v2048 = vshll.u32 2102212464, %v2036
    %v2049 = vshrl.u32 920167782, %v2037
    %v2050 = vor.u32 %v2048, %v2049
    %v2051 = vshll.u32 920167782, %v2036
    %v2052 = vshrl.u32 1326507024, %v2037
    %v2053 = vor.u32 %v2051, %v2052
    %vm2054 = vcmp.lt.s32.totalorder %v2035, 1
    %vm2055 = vcmp.lt.s32.totalorder %v2035, 2
    %vm2056 = vcmp.lt.s32.totalorder %v2035, 3
    %vm2057 = vcmp.lt.s32.totalorder %v2035, 4
    %v2058 = vsel %vm2054, %v2038, %v2041
    %v2059 = vsel %vm2057, %v2047, 2102212464
    %v2060 = vsel %vm2056, %v2044, %v2059
    %v2061 = vsel %vm2055, %v2058, %v2060
    %v2062 = vsel %vm2054, %v2041, %v2044
    %v2063 = vsel %vm2057, %v2050, 920167782
    %v2064 = vsel %vm2056, %v2047, %v2063
    %v2065 = vsel %vm2055, %v2062, %v2064
    %v2066 = vsel %vm2054, %v2044, %v2047
    %v2067 = vsel %vm2057, %v2053, 1326507024
    %v2068 = vsel %vm2056, %v2050, %v2067
    %v2069 = vsel %vm2055, %v2066, %v2068
    %v2070 = vshll.u32 %v2030, 8
    %v2071 = vand.u32 %v2070, 65535
    %v2072 = vshrl.u32 %v2070, 16
    %v2073 = vand.u32 %v2069, 65535
    %v2074 = vshrl.u32 %v2069, 16
    %v2075 = vmul.u32 %v2071, %v2073
    %v2076 = vmul.u32 %v2071, %v2074
    %v2077 = vmul.u32 %v2072, %v2073
    %v2078 = vmul.u32 %v2072, %v2074
    %v2079 = vshll.u32 %v2076, 16
    %v2080 = vshrl.u32 %v2076, 16
    %v2081 = vshll.u32 %v2077, 16
    %v2082 = vshrl.u32 %v2077, 16
    %vm2083 = vc.u32 %v2075, %v2079
    %v2084 = vsel %vm2083, 1, 0
    %v2085 = vadd.s32 %v2075, %v2079
    %v2086 = vadd.s32 %v2078, %v2084
    %vm2087 = vc.u32 %v2085, %v2081
    %v2088 = vsel %vm2087, 1, 0
    %v2089 = vadd.s32 %v2085, %v2081
    %v2090 = vadd.s32 %v2086, %v2088
    %v2091 = vadd.s32 %v2090, %v2080
    %v2092 = vadd.s32 %v2091, %v2082
    %v2093 = vand.u32 %v2070, 65535
    %v2094 = vshrl.u32 %v2070, 16
    %v2095 = vand.u32 %v2065, 65535
    %v2096 = vshrl.u32 %v2065, 16
    %v2097 = vmul.u32 %v2093, %v2095
    %v2098 = vmul.u32 %v2093, %v2096
    %v2099 = vmul.u32 %v2094, %v2095
    %v2100 = vmul.u32 %v2094, %v2096
    %v2101 = vshll.u32 %v2098, 16
    %v2102 = vshrl.u32 %v2098, 16
    %v2103 = vshll.u32 %v2099, 16
    %v2104 = vshrl.u32 %v2099, 16
    %vm2105 = vc.u32 %v2097, %v2101
    %v2106 = vsel %vm2105, 1, 0
    %v2107 = vadd.s32 %v2097, %v2101
    %v2108 = vadd.s32 %v2100, %v2106
    %vm2109 = vc.u32 %v2107, %v2103
    %v2110 = vsel %vm2109, 1, 0
    %v2111 = vadd.s32 %v2107, %v2103
    %v2112 = vadd.s32 %v2108, %v2110
    %v2113 = vadd.s32 %v2112, %v2102
    %v2114 = vadd.s32 %v2113, %v2104
    %v2115 = vmul.u32 %v2070, %v2061
    %v2116 = vadd.s32 %v2092, %v2111
    %vm2117 = vc.u32 %v2092, %v2111
    %v2118 = vadd.s32 %v2114, 1
    %v2119 = vsel %vm2117, %v2118, %v2114
    %v2120 = vadd.s32 %v2115, %v2119
    %v2121 = vadd.s32 %v2120, 536870912
    %v2122 = vshrl.u32 %v2121, 30
    %v2123 = vshll.u32 %v2122, 30
    %v2124 = vsub.s32 %v2120, %v2123
    %vm2125 = vcmp.lt.s32.totalorder %v2124, 0
    %v2126 = vsub.s32 0, %v2124
    %v2127 = vsel %vm2125, %v2126, %v2124
    %v2128 = vclz %v2127
    %v2129 = vsub.s32 %v2128, 2
    %vm2130 = vcmp.gt.s32.totalorder 0, %v2129
    %v2131 = vsel %vm2130, 0, %v2129
    %v2132 = vsub.s32 32, %v2131
    %v2133 = vshll.u32 %v2124, %v2131
    %v2134 = vshrl.u32 %v2116, %v2132
    %v2135 = vor.u32 %v2133, %v2134
    %v2136 = vsub.s32 4294967266, %v2131
    %v2137 = vadd.s32 %v2136, 127
    %v2138 = vshll.u32 %v2137, 23
    %v2139 = vor.u32 4788187, %v2138
    %v2140 = vand.u32 2147483647, %v2139
    %v2142 = vcvt.s32.f32 %v2135
    %v2143 = vmul.f32 %v2142, %v2140
    %v2144 = vxor.u32 %v2143, 2147483648
    %v2145 = vsel %vm2024, %v2144, %v2143
    %v2146 = vsub.s32 4, %v2122
    %v2147 = vsel %vm2024, %v2146, %v2122
    %v2148 = vsel %vm2023, %v936, %v2145
    %v2149 = vsel %vm2023, 0, %v2147
    %v2150 = vmul.f32 %v2148, %v2148
    %v2151 = vmul.f32 %v2150, -0.001358992
    %v2152 = vadd.f32 %v2151, 0.041655596
    %v2153 = vmul.f32 %v2150, %v2152
    %v2154 = vadd.f32 %v2153, -0.4999988
    %v2155 = vmul.f32 %v2150, %v2154
    %v2156 = vadd.f32 1.0, %v2155
    %v2157 = vmul.f32 %v2148, %v2148
    %v2158 = vmul.f32 %v2157, -0.00019511016
    %v2159 = vadd.f32 %v2158, 0.008332121
    %v2160 = vmul.f32 %v2157, %v2159
    %v2161 = vadd.f32 %v2160, -0.16666654
    %v2162 = vmul.f32 %v2157, %v2161
    %v2163 = vadd.f32 %v2162, 1.0
    %v2164 = vmul.f32 %v2163, %v2148
    %vm2165 = vweird.f32 %v936
    %v2166 = vadd.s32 %v2149, 3
    %v2167 = vand.u32 %v2166, 3
    %vm2168 = vcmp.lt.s32.totalorder %v2167, 2
    %vm2169 = vcmp.eq.s32.totalorder %v2167, 0
    %v2170 = vxor.u32 %v2164, 2147483648
    %v2171 = vsel %vm2169, %v2156, %v2170
    %vm2172 = vcmp.eq.s32.totalorder %v2167, 2
    %v2173 = vxor.u32 %v2156, 2147483648
    %v2174 = vsel %vm2172, %v2173, %v2164
    %v2175 = vsel %vm2168, %v2171, %v2174
    %v2176 = vsel %vm2165, nan, %v2175
    %2177 = vst [vmem:[#allocation2] sm:$0xff] %v1091
    %2178 = vst [vmem:[#allocation2 + $0x8] sm:$0xff] %v1246
    %2179 = vst [vmem:[#allocation2 + $0x10] sm:$0xff] %v1401
    %2180 = vst [vmem:[#allocation2 + $0x18] sm:$0xff] %v1556
    %2181 = vst [vmem:[#allocation2 + $0x20] sm:$0xff] %v1711
    %2182 = vst [vmem:[#allocation2 + $0x28] sm:$0xff] %v1866
    %2183 = vst [vmem:[#allocation2 + $0x30] sm:$0xff] %v2021
    %2184 = vst [vmem:[#allocation2 + $0x38] sm:$0xff] %v2176
    // Predicated region
    $region18: #{tpu_custom_call.1} parent=1 // pred_check
      _
    $region19: #{tpu_custom_call.1} parent=1 // pred_check_branch
      %2186 = sbr.rel (0) target = $region21
    $region20: #{tpu_custom_call.1} parent=1 // pred_region
      %2188 = vsyncadd [#allocation3], 0
      %s2189 = sshll.u32 [#allocation2], 4
      %s2190 = int_to_ptr.vmem [resolvable:$true] %s2189
      %s2191 = sshll.u32 %s4, 4
      %s2192 = int_to_ptr.hbm [resolvable:$true] %s2191
      %2197 = dma.vmem_to_hbm [thread:$0]  %s2190, 1024, %s2192, [#allocation3], 256, 256, 16
    $region21: #{tpu_custom_call.1} parent=1 // pred_fallthru
      _
    // Predicated region
    $region22: #{tpu_custom_call.1} parent=1 // pred_check
      _
    $region23: #{tpu_custom_call.1} parent=1 // pred_check_branch
      %2199 = sbr.rel (0) target = $region25
    $region24: #{tpu_custom_call.1} parent=1 // pred_region
      %2201 = dma.done [#allocation3], 1024
    $region25: #{tpu_custom_call.1} parent=1 // pred_fallthru
      _
    %2202 = vsyncpa [#allocation3], 1

</llo_original>
